<compile_context>
chip_gen: v7x
topology: tpu7x:2x2x1
jax: 0.10.0
libtpu: 0.0.40
codegen_flags: <defaults>
</compile_context>

<pallas_src>
import math
import jax
import jax.numpy as jnp
from jax import lax
from jax.experimental import pallas as pl
from jax.experimental.pallas import tpu as pltpu

# ----- small, TPU-friendly synthetic configuration ---------------------------
B = 2            # batch
SEQ = 8          # input sequence length
NUM_MEMORY = 8   # number of retrieval/memory tokens appended
T = SEQ + NUM_MEMORY          # 16 tokens total per sequence
N = B * T                     # 32 rows in the merged (batch*token) layout
VOCAB = 64
D = 256          # hidden size
H = 2            # attention heads
HD = D // H      # head dim (128 -> lane aligned)
ROPE_BASE = 10000.0
EOS_ID = 2
SCALE = 1.0 / math.sqrt(HD)   # folded into Wq at init time
NEG_INF = -1e30


# ----- fused Pallas kernel ----------------------------------------------------
def fused_encoder_attn_kernel(ids_ref, embed_ref, retr_ref, wqkv_ref, wo_ref,
                              cos_ref, sin_ref, bias_ref, out_ref, qkv_scr):
    """Fused embed-gather + retrieval concat + qkv proj + RoPE + attention + o_proj.

    ids_ref  : (B*SEQ,)      i32  SMEM  token ids
    embed_ref: (VOCAB, 1, D) f32  VMEM  embedding table (leading-dim gather)
    retr_ref : (1, D)        f32  VMEM  retrieval token parameter
    wqkv_ref : (D, 3D)       bf16 VMEM  packed [Wq*scale | Wk | Wv]
    wo_ref   : (D, D)        bf16 VMEM  output projection
    cos_ref  : (T, HD)       f32  VMEM  cos table (positions 0..T-1)
    sin_ref  : (T, HD)       f32  VMEM  sin table, rotate_half sign pre-folded
    bias_ref : (N, N)        f32  VMEM  block-diagonal-causal additive mask
    out_ref  : (N, D)        f32  attention-block output
    qkv_scr  : (N, 3D)       f32  VMEM scratch holding the staged qkv projection
    """
    # ---- build hidden states in-kernel: [token embeds ++ retrieval] -------
    retr_blk = jnp.broadcast_to(retr_ref[...], (NUM_MEMORY, D))      # hoisted once
    parts = []
    for b in range(B):
        for s in range(SEQ):
            tok = ids_ref[b * SEQ + s]                               # SMEM scalar
            parts.append(embed_ref[tok])                             # (1, D) gather
        parts.append(retr_blk)                                       # (NUM_MEMORY, D)
    x = jnp.concatenate(parts, axis=0).astype(jnp.bfloat16)          # (N, D)

    # ---- packed q/k/v projection (one MXU matmul), staged in VMEM ---------
    qkv_scr[...] = jnp.dot(x, wqkv_ref[...],
                           preferred_element_type=jnp.float32)       # (N, 3D) f32

    # ---- RoPE tables tiled once to (N, HD) --------------------------------
    cos = jnp.concatenate([cos_ref[...]] * B, axis=0)                # (N, HD)
    sin = jnp.concatenate([sin_ref[...]] * B, axis=0)                # sign folded

    def rope(xh):  # rotate_half == roll(HD/2) with the sign baked into sin
        return xh * cos + pltpu.roll(xh, shift=HD // 2, axis=1) * sin

    bias = bias_ref[...]                                             # (N, N)

    # ---- per-head attention, merged over batch; o_proj accumulated per head
    acc = None
    for hh in range(H):
        q = rope(qkv_scr[:, pl.ds(hh * HD, HD)]).astype(jnp.bfloat16)        # (N, HD)
        k = rope(qkv_scr[:, pl.ds(D + hh * HD, HD)]).astype(jnp.bfloat16)
        v = qkv_scr[:, pl.ds(2 * D + hh * HD, HD)].astype(jnp.bfloat16)

        # Contract last dims directly (no .T); scale already folded into Wq.
        s = lax.dot_general(q, k, (((1,), (1,)), ((), ())),
                            preferred_element_type=jnp.float32)              # (N, N)
        s = s + bias                                      # block-diag causal mask
        m = jnp.max(s, axis=-1, keepdims=True)
        p = jnp.exp(s - m)
        l = jnp.sum(p, axis=-1, keepdims=True)
        o = jnp.dot(p.astype(jnp.bfloat16), v,
                    preferred_element_type=jnp.float32)                       # (N, HD)
        o = o * pl.reciprocal(l, approx=True)             # EUP slot; ~1e-4 rel err
        # per-head slice of o_proj: (N, HD) @ (HD, D), f32 accumulation
        part = jnp.dot(o.astype(jnp.bfloat16), wo_ref[pl.ds(hh * HD, HD), :],
                       preferred_element_type=jnp.float32)
        acc = part if acc is None else acc + part

    out_ref[...] = acc                                    # lane-dense (N, 256) f32
    # TODO(synk): when SEQ/NUM_MEMORY/B scale up, add a token-tiled grid
    # (sublane multiples of 8, last dim lane-dense) with a leading "parallel"
    # axis so v7x's second TensorCore is used; at N=32 a single invocation
    # avoids the ~0.35us/step grid overhead.


def encoder_attention_block(ids_flat, embed3d, retr, wqkv, wo, cos, sin, bias):
    vmem = pl.BlockSpec(memory_space=pltpu.MemorySpace.VMEM)
    smem = pl.BlockSpec(memory_space=pltpu.MemorySpace.SMEM)
    return pl.pallas_call(
        fused_encoder_attn_kernel,
        out_shape=jax.ShapeDtypeStruct((N, D), jnp.float32),
        in_specs=[smem, vmem, vmem, vmem, vmem, vmem, vmem, vmem],
        out_specs=vmem,
        scratch_shapes=[pltpu.VMEM((N, 3 * D), jnp.float32)],
        compiler_params=pltpu.CompilerParams(vmem_limit_bytes=32 * 1024 * 1024),
    )(ids_flat, embed3d, retr, wqkv, wo, cos, sin, bias)


# ----- host-side tables / params ---------------------------------------------
def rope_tables(t, hd):
    inv_freq = 1.0 / (ROPE_BASE ** (jnp.arange(0, hd, 2, dtype=jnp.float32) / hd))
    pos = jnp.arange(t, dtype=jnp.float32)
    freqs = jnp.outer(pos, inv_freq)                      # (t, hd/2)
    emb = jnp.concatenate([freqs, freqs], axis=-1)        # (t, hd)
    # rotate_half(x) == roll(x, hd//2) * sign, sign = [-1]*hd/2 ++ [+1]*hd/2
    sign = jnp.concatenate([-jnp.ones((hd // 2,), jnp.float32),
                            jnp.ones((hd // 2,), jnp.float32)])
    return jnp.cos(emb), jnp.sin(emb) * sign[None, :]


def causal_block_bias(bsz, t):
    """Additive mask: 0 where (same batch AND col<=row), -1e30 elsewhere."""
    n = bsz * t
    row = jnp.arange(n)[:, None]
    col = jnp.arange(n)[None, :]
    allowed = (col <= row) & ((row // t) == (col // t))
    return jnp.where(allowed, 0.0, NEG_INF).astype(jnp.float32)


def init_params(key):
    ks = jax.random.split(key, 5)
    scale = 0.02
    embed = jax.random.normal(ks[0], (VOCAB, D), jnp.float32) * scale
    wq = jax.random.normal(ks[1], (D, D), jnp.float32) * scale
    wk = jax.random.normal(ks[2], (D, D), jnp.float32) * scale
    wv = jax.random.normal(ks[3], (D, D), jnp.float32) * scale
    wo = jax.random.normal(ks[4], (D, D), jnp.float32) * scale
    cos, sin_signed = rope_tables(T, HD)
    return {
        "embed_tokens": embed,
        # retrieval_token initialized from the eos-token embedding, as in __init__
        "retrieval_token": embed[EOS_ID][None, :],                    # (1, D)
        # packed [Wq*scale | Wk | Wv] in bf16 (RoPE is linear -> scale fold exact)
        "wqkv": jnp.concatenate([wq * SCALE, wk, wv], axis=1).astype(jnp.bfloat16),
        "wo": wo.astype(jnp.bfloat16),
        "cos": cos,                                                   # (T, HD)
        "sin_signed": sin_signed,                                     # (T, HD)
        "attn_bias": causal_block_bias(B, T),                         # (N, N)
    }


@jax.jit
def encoder_forward(input_ids, params):
    # self_attn.memory.append(hidden_states[:, -num_memory:, :]) -- the last
    # num_memory rows of the layer input are the retrieval token broadcast.
    memory = jnp.broadcast_to(params["retrieval_token"][None, :, :],
                              (B, NUM_MEMORY, D))
    out2d = encoder_attention_block(
        input_ids.reshape(-1).astype(jnp.int32),
        params["embed_tokens"][:, None, :],              # (VOCAB, 1, D) for gather
        params["retrieval_token"],
        params["wqkv"], params["wo"],
        params["cos"], params["sin_signed"], params["attn_bias"])
    # TODO(synk): LoRA adapters on q_proj/v_proj and the rest of the Llama
    # decoder layer (RMSNorm, MLP, residuals) are outside the provided
    # attention-forward code and are not modeled here.
    return out2d.reshape(B, T, D), memory


if __name__ == "__main__":
    key = jax.random.PRNGKey(0)
    k_ids, k_params = jax.random.split(key)
    params = init_params(k_params)
    input_ids = jax.random.randint(k_ids, (B, SEQ), 0, VOCAB, dtype=jnp.int32)

    out, memory = encoder_forward(input_ids, params)
    jax.block_until_ready((out, memory))

    assert out.shape == (B, T, D) and memory.shape == (B, NUM_MEMORY, D)
    assert jnp.all(jnp.isfinite(out)) and jnp.all(jnp.isfinite(memory))
    print("KERNEL_OK")
</pallas_src>

<mosaic_0001>
module attributes {stable_mosaic.version = 11 : i64} {
  func.func @fused_encoder_attn_kernel(%arg0: memref<16xi32, #tpu.memory_space<smem>>, %arg1: memref<64x1x256xf32, #tpu.memory_space<vmem>>, %arg2: memref<1x256xf32, #tpu.memory_space<vmem>>, %arg3: memref<256x768xbf16, #tpu.memory_space<vmem>>, %arg4: memref<256x256xbf16, #tpu.memory_space<vmem>>, %arg5: memref<16x128xf32, #tpu.memory_space<vmem>>, %arg6: memref<16x128xf32, #tpu.memory_space<vmem>>, %arg7: memref<32x32xf32, #tpu.memory_space<vmem>>, %arg8: memref<32x256xf32, #tpu.memory_space<vmem>>, %arg9: memref<32x768xf32, #tpu.memory_space<vmem>>) attributes {dimension_semantics = [], scalar_prefetch = 0 : i64, scratch_operands = 1 : i64, tpu.core_type = #tpu.core_type<tc>} {
    %c0 = arith.constant 0 : index
    %c0_0 = arith.constant 0 : index
    %0 = vector.load %arg2[%c0, %c0_0] : memref<1x256xf32, #tpu.memory_space<vmem>>, vector<1x256xf32>
    %1 = vector.shape_cast %0 : vector<1x256xf32> to vector<1x256xf32>
    %2 = vector.broadcast %1 : vector<1x256xf32> to vector<8x256xf32>
    %c0_1 = arith.constant 0 : index
    %3 = memref.load %arg0[%c0_1] : memref<16xi32, #tpu.memory_space<smem>>
    %4 = arith.index_cast %3 : i32 to index
    %c0_2 = arith.constant 0 : index
    %c0_3 = arith.constant 0 : index
    %5 = vector.load %arg1[%4, %c0_2, %c0_3] : memref<64x1x256xf32, #tpu.memory_space<vmem>>, vector<1x1x256xf32>
    %6 = vector.shape_cast %5 : vector<1x1x256xf32> to vector<1x256xf32>
    %c1 = arith.constant 1 : index
    %7 = memref.load %arg0[%c1] : memref<16xi32, #tpu.memory_space<smem>>
    %8 = arith.index_cast %7 : i32 to index
    %c0_4 = arith.constant 0 : index
    %c0_5 = arith.constant 0 : index
    %9 = vector.load %arg1[%8, %c0_4, %c0_5] : memref<64x1x256xf32, #tpu.memory_space<vmem>>, vector<1x1x256xf32>
    %10 = vector.shape_cast %9 : vector<1x1x256xf32> to vector<1x256xf32>
    %c2 = arith.constant 2 : index
    %11 = memref.load %arg0[%c2] : memref<16xi32, #tpu.memory_space<smem>>
    %12 = arith.index_cast %11 : i32 to index
    %c0_6 = arith.constant 0 : index
    %c0_7 = arith.constant 0 : index
    %13 = vector.load %arg1[%12, %c0_6, %c0_7] : memref<64x1x256xf32, #tpu.memory_space<vmem>>, vector<1x1x256xf32>
    %14 = vector.shape_cast %13 : vector<1x1x256xf32> to vector<1x256xf32>
    %c3 = arith.constant 3 : index
    %15 = memref.load %arg0[%c3] : memref<16xi32, #tpu.memory_space<smem>>
    %16 = arith.index_cast %15 : i32 to index
    %c0_8 = arith.constant 0 : index
    %c0_9 = arith.constant 0 : index
    %17 = vector.load %arg1[%16, %c0_8, %c0_9] : memref<64x1x256xf32, #tpu.memory_space<vmem>>, vector<1x1x256xf32>
    %18 = vector.shape_cast %17 : vector<1x1x256xf32> to vector<1x256xf32>
    %c4 = arith.constant 4 : index
    %19 = memref.load %arg0[%c4] : memref<16xi32, #tpu.memory_space<smem>>
    %20 = arith.index_cast %19 : i32 to index
    %c0_10 = arith.constant 0 : index
    %c0_11 = arith.constant 0 : index
    %21 = vector.load %arg1[%20, %c0_10, %c0_11] : memref<64x1x256xf32, #tpu.memory_space<vmem>>, vector<1x1x256xf32>
    %22 = vector.shape_cast %21 : vector<1x1x256xf32> to vector<1x256xf32>
    %c5 = arith.constant 5 : index
    %23 = memref.load %arg0[%c5] : memref<16xi32, #tpu.memory_space<smem>>
    %24 = arith.index_cast %23 : i32 to index
    %c0_12 = arith.constant 0 : index
    %c0_13 = arith.constant 0 : index
    %25 = vector.load %arg1[%24, %c0_12, %c0_13] : memref<64x1x256xf32, #tpu.memory_space<vmem>>, vector<1x1x256xf32>
    %26 = vector.shape_cast %25 : vector<1x1x256xf32> to vector<1x256xf32>
    %c6 = arith.constant 6 : index
    %27 = memref.load %arg0[%c6] : memref<16xi32, #tpu.memory_space<smem>>
    %28 = arith.index_cast %27 : i32 to index
    %c0_14 = arith.constant 0 : index
    %c0_15 = arith.constant 0 : index
    %29 = vector.load %arg1[%28, %c0_14, %c0_15] : memref<64x1x256xf32, #tpu.memory_space<vmem>>, vector<1x1x256xf32>
    %30 = vector.shape_cast %29 : vector<1x1x256xf32> to vector<1x256xf32>
    %c7 = arith.constant 7 : index
    %31 = memref.load %arg0[%c7] : memref<16xi32, #tpu.memory_space<smem>>
    %32 = arith.index_cast %31 : i32 to index
    %c0_16 = arith.constant 0 : index
    %c0_17 = arith.constant 0 : index
    %33 = vector.load %arg1[%32, %c0_16, %c0_17] : memref<64x1x256xf32, #tpu.memory_space<vmem>>, vector<1x1x256xf32>
    %34 = vector.shape_cast %33 : vector<1x1x256xf32> to vector<1x256xf32>
    %c8 = arith.constant 8 : index
    %35 = memref.load %arg0[%c8] : memref<16xi32, #tpu.memory_space<smem>>
    %36 = arith.index_cast %35 : i32 to index
    %c0_18 = arith.constant 0 : index
    %c0_19 = arith.constant 0 : index
    %37 = vector.load %arg1[%36, %c0_18, %c0_19] : memref<64x1x256xf32, #tpu.memory_space<vmem>>, vector<1x1x256xf32>
    %38 = vector.shape_cast %37 : vector<1x1x256xf32> to vector<1x256xf32>
    %c9 = arith.constant 9 : index
    %39 = memref.load %arg0[%c9] : memref<16xi32, #tpu.memory_space<smem>>
    %40 = arith.index_cast %39 : i32 to index
    %c0_20 = arith.constant 0 : index
    %c0_21 = arith.constant 0 : index
    %41 = vector.load %arg1[%40, %c0_20, %c0_21] : memref<64x1x256xf32, #tpu.memory_space<vmem>>, vector<1x1x256xf32>
    %42 = vector.shape_cast %41 : vector<1x1x256xf32> to vector<1x256xf32>
    %c10 = arith.constant 10 : index
    %43 = memref.load %arg0[%c10] : memref<16xi32, #tpu.memory_space<smem>>
    %44 = arith.index_cast %43 : i32 to index
    %c0_22 = arith.constant 0 : index
    %c0_23 = arith.constant 0 : index
    %45 = vector.load %arg1[%44, %c0_22, %c0_23] : memref<64x1x256xf32, #tpu.memory_space<vmem>>, vector<1x1x256xf32>
    %46 = vector.shape_cast %45 : vector<1x1x256xf32> to vector<1x256xf32>
    %c11 = arith.constant 11 : index
    %47 = memref.load %arg0[%c11] : memref<16xi32, #tpu.memory_space<smem>>
    %48 = arith.index_cast %47 : i32 to index
    %c0_24 = arith.constant 0 : index
    %c0_25 = arith.constant 0 : index
    %49 = vector.load %arg1[%48, %c0_24, %c0_25] : memref<64x1x256xf32, #tpu.memory_space<vmem>>, vector<1x1x256xf32>
    %50 = vector.shape_cast %49 : vector<1x1x256xf32> to vector<1x256xf32>
    %c12 = arith.constant 12 : index
    %51 = memref.load %arg0[%c12] : memref<16xi32, #tpu.memory_space<smem>>
    %52 = arith.index_cast %51 : i32 to index
    %c0_26 = arith.constant 0 : index
    %c0_27 = arith.constant 0 : index
    %53 = vector.load %arg1[%52, %c0_26, %c0_27] : memref<64x1x256xf32, #tpu.memory_space<vmem>>, vector<1x1x256xf32>
    %54 = vector.shape_cast %53 : vector<1x1x256xf32> to vector<1x256xf32>
    %c13 = arith.constant 13 : index
    %55 = memref.load %arg0[%c13] : memref<16xi32, #tpu.memory_space<smem>>
    %56 = arith.index_cast %55 : i32 to index
    %c0_28 = arith.constant 0 : index
    %c0_29 = arith.constant 0 : index
    %57 = vector.load %arg1[%56, %c0_28, %c0_29] : memref<64x1x256xf32, #tpu.memory_space<vmem>>, vector<1x1x256xf32>
    %58 = vector.shape_cast %57 : vector<1x1x256xf32> to vector<1x256xf32>
    %c14 = arith.constant 14 : index
    %59 = memref.load %arg0[%c14] : memref<16xi32, #tpu.memory_space<smem>>
    %60 = arith.index_cast %59 : i32 to index
    %c0_30 = arith.constant 0 : index
    %c0_31 = arith.constant 0 : index
    %61 = vector.load %arg1[%60, %c0_30, %c0_31] : memref<64x1x256xf32, #tpu.memory_space<vmem>>, vector<1x1x256xf32>
    %62 = vector.shape_cast %61 : vector<1x1x256xf32> to vector<1x256xf32>
    %c15 = arith.constant 15 : index
    %63 = memref.load %arg0[%c15] : memref<16xi32, #tpu.memory_space<smem>>
    %64 = arith.index_cast %63 : i32 to index
    %c0_32 = arith.constant 0 : index
    %c0_33 = arith.constant 0 : index
    %65 = vector.load %arg1[%64, %c0_32, %c0_33] : memref<64x1x256xf32, #tpu.memory_space<vmem>>, vector<1x1x256xf32>
    %66 = vector.shape_cast %65 : vector<1x1x256xf32> to vector<1x256xf32>
    %67 = tpu.concatenate %6, %10, %14, %18, %22, %26, %30, %34, %2, %38, %42, %46, %50, %54, %58, %62 in 0 : vector<1x256xf32>, vector<1x256xf32>, vector<1x256xf32>, vector<1x256xf32>, vector<1x256xf32>, vector<1x256xf32>, vector<1x256xf32>, vector<1x256xf32>, vector<8x256xf32>, vector<1x256xf32>, vector<1x256xf32>, vector<1x256xf32>, vector<1x256xf32>, vector<1x256xf32>, vector<1x256xf32>, vector<1x256xf32> -> vector<23x256xf32>
    %68 = tpu.concatenate %66, %2 in 0 : vector<1x256xf32>, vector<8x256xf32> -> vector<9x256xf32>
    %69 = tpu.concatenate %67, %68 in 0 : vector<23x256xf32>, vector<9x256xf32> -> vector<32x256xf32>
    %70 = arith.truncf %69 : vector<32x256xf32> to vector<32x256xbf16>
    %c0_34 = arith.constant 0 : index
    %c0_35 = arith.constant 0 : index
    %71 = vector.load %arg3[%c0_34, %c0_35] : memref<256x768xbf16, #tpu.memory_space<vmem>>, vector<256x768xbf16>
    %cst = arith.constant dense<0.000000e+00> : vector<32x768xf32>
    %72 = tpu.matmul %70, %71, %cst {dimension_numbers = #tpu.dot_dimension_numbers<[1], [0], [0], [1], [0, 0, 1, 1], [], []>} : vector<32x256xbf16>, vector<256x768xbf16>, vector<32x768xf32> -> vector<32x768xf32>
    %c0_36 = arith.constant 0 : index
    %c0_37 = arith.constant 0 : index
    %73 = vector.load %arg9[%c0_36, %c0_37] : memref<32x768xf32, #tpu.memory_space<vmem>>, vector<32x768xf32>
    tpu.vector_store %arg9[%c0_36, %c0_37], %72 {strides = array<i32>} : memref<32x768xf32, #tpu.memory_space<vmem>>, vector<32x768xf32>,
    %c0_38 = arith.constant 0 : index
    %c0_39 = arith.constant 0 : index
    %74 = vector.load %arg5[%c0_38, %c0_39] : memref<16x128xf32, #tpu.memory_space<vmem>>, vector<16x128xf32>
    %75 = tpu.concatenate %74, %74 in 0 : vector<16x128xf32>, vector<16x128xf32> -> vector<32x128xf32>
    %c0_40 = arith.constant 0 : index
    %c0_41 = arith.constant 0 : index
    %76 = vector.load %arg6[%c0_40, %c0_41] : memref<16x128xf32, #tpu.memory_space<vmem>>, vector<16x128xf32>
    %77 = tpu.concatenate %76, %76 in 0 : vector<16x128xf32>, vector<16x128xf32> -> vector<32x128xf32>
    %c0_42 = arith.constant 0 : index
    %c0_43 = arith.constant 0 : index
    %78 = vector.load %arg7[%c0_42, %c0_43] : memref<32x32xf32, #tpu.memory_space<vmem>>, vector<32x32xf32>
    %c0_44 = arith.constant 0 : index
    %c0_45 = arith.constant 0 : index
    %79 = vector.load %arg9[%c0_44, %c0_45] : memref<32x768xf32, #tpu.memory_space<vmem>>, vector<32x128xf32>
    %80 = arith.mulf %79, %75 : vector<32x128xf32>
    %c64_i32 = arith.constant 64 : i32
    %81 = tpu.dynamic_rotate %79 by %c64_i32 dim 1 : vector<32x128xf32>, i32 -> vector<32x128xf32>
    %82 = arith.mulf %81, %77 : vector<32x128xf32>
    %83 = arith.addf %80, %82 : vector<32x128xf32>
    %84 = arith.truncf %83 : vector<32x128xf32> to vector<32x128xbf16>
    %c0_46 = arith.constant 0 : index
    %c256 = arith.constant 256 : index
    %85 = vector.load %arg9[%c0_46, %c256] : memref<32x768xf32, #tpu.memory_space<vmem>>, vector<32x128xf32>
    %86 = arith.mulf %85, %75 : vector<32x128xf32>
    %c64_i32_47 = arith.constant 64 : i32
    %87 = tpu.dynamic_rotate %85 by %c64_i32_47 dim 1 : vector<32x128xf32>, i32 -> vector<32x128xf32>
    %88 = arith.mulf %87, %77 : vector<32x128xf32>
    %89 = arith.addf %86, %88 : vector<32x128xf32>
    %90 = arith.truncf %89 : vector<32x128xf32> to vector<32x128xbf16>
    %c0_48 = arith.constant 0 : index
    %c512 = arith.constant 512 : index
    %91 = vector.load %arg9[%c0_48, %c512] : memref<32x768xf32, #tpu.memory_space<vmem>>, vector<32x128xf32>
    %92 = arith.truncf %91 : vector<32x128xf32> to vector<32x128xbf16>
    %cst_49 = arith.constant dense<0.000000e+00> : vector<32x32xf32>
    %93 = tpu.matmul %84, %90, %cst_49 {dimension_numbers = #tpu.dot_dimension_numbers<[1], [1], [0], [0], [0, 0, 1, 0], [], []>} : vector<32x128xbf16>, vector<32x128xbf16>, vector<32x32xf32> -> vector<32x32xf32>
    %94 = arith.addf %93, %78 : vector<32x32xf32>
    %cst_50 = arith.constant dense<0xFF800000> : vector<32xf32>
    %95 = vector.multi_reduction <maximumf>, %94, %cst_50 [1] : vector<32x32xf32> to vector<32xf32>
    %96 = vector.shape_cast %95 : vector<32xf32> to vector<32x1xf32>
    %97 = vector.broadcast %96 : vector<32x1xf32> to vector<32x32xf32>
    %98 = arith.subf %94, %97 : vector<32x32xf32>
    %99 = math.exp %98 : vector<32x32xf32>
    %cst_51 = arith.constant dense<0.000000e+00> : vector<32xf32>
    %100 = vector.multi_reduction <add>, %99, %cst_51 [1] : vector<32x32xf32> to vector<32xf32>
    %101 = vector.shape_cast %100 : vector<32xf32> to vector<32x1xf32>
    %102 = arith.truncf %99 : vector<32x32xf32> to vector<32x32xbf16>
    %cst_52 = arith.constant dense<0.000000e+00> : vector<32x128xf32>
    %103 = tpu.matmul %102, %92, %cst_52 {dimension_numbers = #tpu.dot_dimension_numbers<[1], [0], [0], [1], [0, 0, 1, 1], [], []>} : vector<32x32xbf16>, vector<32x128xbf16>, vector<32x128xf32> -> vector<32x128xf32>
    %104 = tpu.reciprocal %101 {approx = true} : vector<32x1xf32> -> vector<32x1xf32>
    %105 = vector.broadcast %104 : vector<32x1xf32> to vector<32x128xf32>
    %106 = arith.mulf %103, %105 : vector<32x128xf32>
    %107 = arith.truncf %106 : vector<32x128xf32> to vector<32x128xbf16>
    %c0_53 = arith.constant 0 : index
    %c0_54 = arith.constant 0 : index
    %108 = vector.load %arg4[%c0_53, %c0_54] : memref<256x256xbf16, #tpu.memory_space<vmem>>, vector<128x256xbf16>
    %cst_55 = arith.constant dense<0.000000e+00> : vector<32x256xf32>
    %109 = tpu.matmul %107, %108, %cst_55 {dimension_numbers = #tpu.dot_dimension_numbers<[1], [0], [0], [1], [0, 0, 1, 1], [], []>} : vector<32x128xbf16>, vector<128x256xbf16>, vector<32x256xf32> -> vector<32x256xf32>
    %c0_56 = arith.constant 0 : index
    %c128 = arith.constant 128 : index
    %110 = vector.load %arg9[%c0_56, %c128] : memref<32x768xf32, #tpu.memory_space<vmem>>, vector<32x128xf32>
    %111 = arith.mulf %110, %75 : vector<32x128xf32>
    %c64_i32_57 = arith.constant 64 : i32
    %112 = tpu.dynamic_rotate %110 by %c64_i32_57 dim 1 : vector<32x128xf32>, i32 -> vector<32x128xf32>
    %113 = arith.mulf %112, %77 : vector<32x128xf32>
    %114 = arith.addf %111, %113 : vector<32x128xf32>
    %115 = arith.truncf %114 : vector<32x128xf32> to vector<32x128xbf16>
    %c0_58 = arith.constant 0 : index
    %c384 = arith.constant 384 : index
    %116 = vector.load %arg9[%c0_58, %c384] : memref<32x768xf32, #tpu.memory_space<vmem>>, vector<32x128xf32>
    %117 = arith.mulf %116, %75 : vector<32x128xf32>
    %c64_i32_59 = arith.constant 64 : i32
    %118 = tpu.dynamic_rotate %116 by %c64_i32_59 dim 1 : vector<32x128xf32>, i32 -> vector<32x128xf32>
    %119 = arith.mulf %118, %77 : vector<32x128xf32>
    %120 = arith.addf %117, %119 : vector<32x128xf32>
    %121 = arith.truncf %120 : vector<32x128xf32> to vector<32x128xbf16>
    %c0_60 = arith.constant 0 : index
    %c640 = arith.constant 640 : index
    %122 = vector.load %arg9[%c0_60, %c640] : memref<32x768xf32, #tpu.memory_space<vmem>>, vector<32x128xf32>
    %123 = arith.truncf %122 : vector<32x128xf32> to vector<32x128xbf16>
    %cst_61 = arith.constant dense<0.000000e+00> : vector<32x32xf32>
    %124 = tpu.matmul %115, %121, %cst_61 {dimension_numbers = #tpu.dot_dimension_numbers<[1], [1], [0], [0], [0, 0, 1, 0], [], []>} : vector<32x128xbf16>, vector<32x128xbf16>, vector<32x32xf32> -> vector<32x32xf32>
    %125 = arith.addf %124, %78 : vector<32x32xf32>
    %cst_62 = arith.constant dense<0xFF800000> : vector<32xf32>
    %126 = vector.multi_reduction <maximumf>, %125, %cst_62 [1] : vector<32x32xf32> to vector<32xf32>
    %127 = vector.shape_cast %126 : vector<32xf32> to vector<32x1xf32>
    %128 = vector.broadcast %127 : vector<32x1xf32> to vector<32x32xf32>
    %129 = arith.subf %125, %128 : vector<32x32xf32>
    %130 = math.exp %129 : vector<32x32xf32>
    %cst_63 = arith.constant dense<0.000000e+00> : vector<32xf32>
    %131 = vector.multi_reduction <add>, %130, %cst_63 [1] : vector<32x32xf32> to vector<32xf32>
    %132 = vector.shape_cast %131 : vector<32xf32> to vector<32x1xf32>
    %133 = arith.truncf %130 : vector<32x32xf32> to vector<32x32xbf16>
    %cst_64 = arith.constant dense<0.000000e+00> : vector<32x128xf32>
    %134 = tpu.matmul %133, %123, %cst_64 {dimension_numbers = #tpu.dot_dimension_numbers<[1], [0], [0], [1], [0, 0, 1, 1], [], []>} : vector<32x32xbf16>, vector<32x128xbf16>, vector<32x128xf32> -> vector<32x128xf32>
    %135 = tpu.reciprocal %132 {approx = true} : vector<32x1xf32> -> vector<32x1xf32>
    %136 = vector.broadcast %135 : vector<32x1xf32> to vector<32x128xf32>
    %137 = arith.mulf %134, %136 : vector<32x128xf32>
    %138 = arith.truncf %137 : vector<32x128xf32> to vector<32x128xbf16>
    %c128_65 = arith.constant 128 : index
    %c0_66 = arith.constant 0 : index
    %139 = vector.load %arg4[%c128_65, %c0_66] : memref<256x256xbf16, #tpu.memory_space<vmem>>, vector<128x256xbf16>
    %cst_67 = arith.constant dense<0.000000e+00> : vector<32x256xf32>
    %140 = tpu.matmul %138, %139, %cst_67 {dimension_numbers = #tpu.dot_dimension_numbers<[1], [0], [0], [1], [0, 0, 1, 1], [], []>} : vector<32x128xbf16>, vector<128x256xbf16>, vector<32x256xf32> -> vector<32x256xf32>
    %141 = arith.addf %109, %140 : vector<32x256xf32>
    %c0_68 = arith.constant 0 : index
    %c0_69 = arith.constant 0 : index
    %142 = vector.load %arg8[%c0_68, %c0_69] : memref<32x256xf32, #tpu.memory_space<vmem>>, vector<32x256xf32>
    tpu.vector_store %arg8[%c0_68, %c0_69], %141 {strides = array<i32>} : memref<32x256xf32, #tpu.memory_space<vmem>>, vector<32x256xf32>,
    return
  }
}

</mosaic_0001>

<llo_original>
// kernel: encoder_forward.1
$region0: #{encoder_forward.1}
  #allocation0 [shape = 'u32[]', space=smem, size = 0x4, offset = 0x4, fixed_abs, tag = 'smem constant byte address 0x4 - core index']
  #allocation1 [shape = 'u32[144,128]{1,0:T(1,128)}', space=vmem, size = 0x12000, scoped, tag = 'internal scratch']
  #allocation2 [shape = 'f32[32,768]{1,0:T(8,128)}', space=vmem, size = 0x18000, scoped, tag = 'scratch operand']
  %s0 = inlined_call_operand.vmem [shape: s32[16], index: 0, kind: input, shape index: {}]
  %s1 = inlined_call_operand.vmem [shape: f32[64,1,256], index: 1, kind: input, shape index: {}]
  %s2 = inlined_call_operand.vmem [shape: f32[1,256], index: 2, kind: input, shape index: {}]
  %s3 = inlined_call_operand.hbm [shape: bf16[256,768], index: 3, kind: input, shape index: {}]
  %s4 = inlined_call_operand.vmem [shape: bf16[256,256], index: 4, kind: input, shape index: {}]
  %s5 = inlined_call_operand.vmem [shape: f32[16,128], index: 5, kind: input, shape index: {}]
  %s6 = inlined_call_operand.hbm [shape: f32[16,128], index: 6, kind: input, shape index: {}]
  %s7 = inlined_call_operand.hbm [shape: f32[32,32], index: 7, kind: input, shape index: {}]
  %s8 = inlined_call_operand.hbm [shape: f32[32,256], index: 8, kind: output, shape index: {}]
  %s9 = sld [smem:[#allocation0]]
  $region58: #{encoder_forward.1} parent=0
    _
  %s11 = ssub.s32 1, %s9
  %s12 = scalar_select 0, %s11, %s9
  $region1: #{encoder_forward.1} parent=0
    #allocation3 [shape = 'u8[512]{0}', space=smem, size = 0x200, scoped, tag = 'input window, operand 0, single buffered']
    #allocation4 [shape = 's32[1]{0}', space=sflag, size = 0x4, scoped, tag = 'scoped memory for encoder_forward.1']
    #allocation5 [shape = 's32[1]{0}', space=sflag, size = 0x4, scoped, tag = 'scoped memory for encoder_forward.1']
    #allocation6 [shape = 's32[1]{0}', space=sflag, size = 0x4, scoped, tag = 'scoped memory for encoder_forward.1']
    #allocation7 [shape = 'u8[393216]{0}', space=vmem, size = 0x60000, scoped, tag = 'input window, operand 3, single buffered']
    #allocation8 [shape = 'u8[8192]{0}', space=vmem, size = 0x2000, scoped, tag = 'input window, operand 6, single buffered']
    #allocation9 [shape = 's32[1]{0}', space=sflag, size = 0x4, scoped, tag = 'scoped memory for encoder_forward.1']
    #allocation10 [shape = 'u8[16384]{0}', space=vmem, size = 0x4000, scoped, tag = 'input window, operand 7, single buffered']
    #allocation11 [shape = 'u8[32768]{0}', space=vmem, size = 0x8000, scoped, tag = 'output window, operand 0, single buffered']
    %13 = vsyncpa [#allocation6], 0
    %14 = vsyncpa [#allocation4], 0
    %15 = vsyncpa [#allocation9], 0
    %16 = vsyncpa [#allocation5], 0
    // Predicated region
    $region2: #{encoder_forward.1} parent=1 // pred_check
      _
    $region3: #{encoder_forward.1} parent=1 // pred_check_branch
      %18 = sbr.rel (0) target = $region5
    $region4: #{encoder_forward.1} parent=1 // pred_region
      %s20 = ssub.s32 16, 16
      %21 = vsyncadd [#allocation6], %s20
      %s23 = sshll.u32 %s0, 4
      %s24 = int_to_ptr.vmem [resolvable:$true] %s23
      %26 = dma.vmem_to_smem %s24, 16, [#allocation3], [#allocation6]
    $region5: #{encoder_forward.1} parent=1 // pred_fallthru
      _
    // Predicated region
    $region6: #{encoder_forward.1} parent=1 // pred_check
      _
    $region7: #{encoder_forward.1} parent=1 // pred_check_branch
      %28 = sbr.rel (0) target = $region9
    $region8: #{encoder_forward.1} parent=1 // pred_region
      _
    $region9: #{encoder_forward.1} parent=1 // pred_fallthru
      _
    // Predicated region
    $region10: #{encoder_forward.1} parent=1 // pred_check
      _
    $region11: #{encoder_forward.1} parent=1 // pred_check_branch
      %30 = sbr.rel (0) target = $region13
    $region12: #{encoder_forward.1} parent=1 // pred_region
      _
    $region13: #{encoder_forward.1} parent=1 // pred_fallthru
      _
    // Predicated region
    $region14: #{encoder_forward.1} parent=1 // pred_check
      _
    $region15: #{encoder_forward.1} parent=1 // pred_check_branch
      %32 = sbr.rel (0) target = $region17
    $region16: #{encoder_forward.1} parent=1 // pred_region
      %s34 = ssub.s32 12288, 12288
      %35 = vsyncadd [#allocation4], %s34
      %s36 = sshll.u32 [#allocation7], 4
      %s37 = int_to_ptr.vmem [resolvable:$true] %s36
      %42 = dma.hbm_to_vmem [thread:$0]  %s3, 12288, %s37, [#allocation4], 384, 384, 24
    $region17: #{encoder_forward.1} parent=1 // pred_fallthru
      _
    // Predicated region
    $region18: #{encoder_forward.1} parent=1 // pred_check
      _
    $region19: #{encoder_forward.1} parent=1 // pred_check_branch
      %44 = sbr.rel (0) target = $region21
    $region20: #{encoder_forward.1} parent=1 // pred_region
      _
    $region21: #{encoder_forward.1} parent=1 // pred_fallthru
      _
    // Predicated region
    $region22: #{encoder_forward.1} parent=1 // pred_check
      _
    $region23: #{encoder_forward.1} parent=1 // pred_check_branch
      %46 = sbr.rel (0) target = $region25
    $region24: #{encoder_forward.1} parent=1 // pred_region
      _
    $region25: #{encoder_forward.1} parent=1 // pred_fallthru
      _
    // Predicated region
    $region26: #{encoder_forward.1} parent=1 // pred_check
      _
    $region27: #{encoder_forward.1} parent=1 // pred_check_branch
      %48 = sbr.rel (0) target = $region29
    $region28: #{encoder_forward.1} parent=1 // pred_region
      %s50 = ssub.s32 256, 256
      %51 = vsyncadd [#allocation9], %s50
      %s52 = sshll.u32 [#allocation8], 4
      %s53 = int_to_ptr.vmem [resolvable:$true] %s52
      %58 = dma.hbm_to_vmem [thread:$0]  %s6, 256, %s53, [#allocation9], 128, 128, 8
    $region29: #{encoder_forward.1} parent=1 // pred_fallthru
      _
    // Predicated region
    $region30: #{encoder_forward.1} parent=1 // pred_check
      _
    $region31: #{encoder_forward.1} parent=1 // pred_check_branch
      %60 = sbr.rel (0) target = $region33
    $region32: #{encoder_forward.1} parent=1 // pred_region
      %s62 = ssub.s32 512, 512
      %63 = vsyncadd [#allocation9], %s62
      %s64 = sshll.u32 [#allocation10], 4
      %s65 = int_to_ptr.vmem [resolvable:$true] %s64
      %70 = dma.hbm_to_vmem [thread:$0]  %s7, 512, %s65, [#allocation9], 128, 128, 8
    $region33: #{encoder_forward.1} parent=1 // pred_fallthru
      _
    // Predicated region
    $region34: #{encoder_forward.1} parent=1 // pred_check
      _
    $region35: #{encoder_forward.1} parent=1 // pred_check_branch
      %72 = sbr.rel (0) target = $region37
    $region36: #{encoder_forward.1} parent=1 // pred_region
      %73 = dma.done [#allocation6], 16
    $region37: #{encoder_forward.1} parent=1 // pred_fallthru
      _
    // Predicated region
    $region38: #{encoder_forward.1} parent=1 // pred_check
      _
    $region39: #{encoder_forward.1} parent=1 // pred_check_branch
      %75 = sbr.rel (0) target = $region41
    $region40: #{encoder_forward.1} parent=1 // pred_region
      %76 = dma.done [#allocation4], 12288
    $region41: #{encoder_forward.1} parent=1 // pred_fallthru
      _
    // Predicated region
    $region42: #{encoder_forward.1} parent=1 // pred_check
      _
    $region43: #{encoder_forward.1} parent=1 // pred_check_branch
      %78 = sbr.rel (0) target = $region45
    $region44: #{encoder_forward.1} parent=1 // pred_region
      %79 = dma.done [#allocation9], 256
    $region45: #{encoder_forward.1} parent=1 // pred_fallthru
      _
    // Predicated region
    $region46: #{encoder_forward.1} parent=1 // pred_check
      _
    $region47: #{encoder_forward.1} parent=1 // pred_check_branch
      %81 = sbr.rel (0) target = $region49
    $region48: #{encoder_forward.1} parent=1 // pred_region
      %82 = dma.done [#allocation9], 512
    $region49: #{encoder_forward.1} parent=1 // pred_fallthru
      _
    %83 = sfence
    %v85 = vld [vmem:[%s2] sm:$0x3]
    %v87 = vlaneseq
    %v88 = vshrl.u32 %v87, 7
    %v89 = vsub.s32 0, %v88
    %v90 = vrot.slane %v85, %v89
    %v91 = vlaneseq
    %v92 = vshrl.u32 %v91, 7
    %v93 = vsub.s32 1, %v92
    %v94 = vrot.slane %v85, %v93
    %s97 = sld [smem:[#allocation3]]
    %s98 = smul.u32 %s97, 2
    %s99 = scalar_lea.vmem %s1, %s98
    %v100 = vld [vmem:[%s99] sm:$0x3]
    %s101 = sld [smem:[#allocation3 + $0x1]]
    %s102 = smul.u32 %s101, 2
    %s103 = scalar_lea.vmem %s1, %s102
    %v104 = vld [vmem:[%s103] sm:$0x3]
    %s105 = sld [smem:[#allocation3 + $0x2]]
    %s106 = smul.u32 %s105, 2
    %s107 = scalar_lea.vmem %s1, %s106
    %v108 = vld [vmem:[%s107] sm:$0x3]
    %s109 = sld [smem:[#allocation3 + $0x3]]
    %s110 = smul.u32 %s109, 2
    %s111 = scalar_lea.vmem %s1, %s110
    %v112 = vld [vmem:[%s111] sm:$0x3]
    %s113 = sld [smem:[#allocation3 + $0x4]]
    %s114 = smul.u32 %s113, 2
    %s115 = scalar_lea.vmem %s1, %s114
    %v116 = vld [vmem:[%s115] sm:$0x3]
    %s117 = sld [smem:[#allocation3 + $0x5]]
    %s118 = smul.u32 %s117, 2
    %s119 = scalar_lea.vmem %s1, %s118
    %v120 = vld [vmem:[%s119] sm:$0x3]
    %s121 = sld [smem:[#allocation3 + $0x6]]
    %s122 = smul.u32 %s121, 2
    %s123 = scalar_lea.vmem %s1, %s122
    %v124 = vld [vmem:[%s123] sm:$0x3]
    %s125 = sld [smem:[#allocation3 + $0x7]]
    %s126 = smul.u32 %s125, 2
    %s127 = scalar_lea.vmem %s1, %s126
    %v128 = vld [vmem:[%s127] sm:$0x3]
    %s129 = sld [smem:[#allocation3 + $0x8]]
    %s130 = smul.u32 %s129, 2
    %s131 = scalar_lea.vmem %s1, %s130
    %v132 = vld [vmem:[%s131] sm:$0x3]
    %s133 = sld [smem:[#allocation3 + $0x9]]
    %s134 = smul.u32 %s133, 2
    %s135 = scalar_lea.vmem %s1, %s134
    %v136 = vld [vmem:[%s135] sm:$0x3]
    %s137 = sld [smem:[#allocation3 + $0xa]]
    %s138 = smul.u32 %s137, 2
    %s139 = scalar_lea.vmem %s1, %s138
    %v140 = vld [vmem:[%s139] sm:$0x3]
    %s141 = sld [smem:[#allocation3 + $0xb]]
    %s142 = smul.u32 %s141, 2
    %s143 = scalar_lea.vmem %s1, %s142
    %v144 = vld [vmem:[%s143] sm:$0x3]
    %s145 = sld [smem:[#allocation3 + $0xc]]
    %s146 = smul.u32 %s145, 2
    %s147 = scalar_lea.vmem %s1, %s146
    %v148 = vld [vmem:[%s147] sm:$0x3]
    %s149 = sld [smem:[#allocation3 + $0xd]]
    %s150 = smul.u32 %s149, 2
    %s151 = scalar_lea.vmem %s1, %s150
    %v152 = vld [vmem:[%s151] sm:$0x3]
    %s153 = sld [smem:[#allocation3 + $0xe]]
    %s154 = smul.u32 %s153, 2
    %s155 = scalar_lea.vmem %s1, %s154
    %v156 = vld [vmem:[%s155] sm:$0x3]
    %s157 = sld [smem:[#allocation3 + $0xf]]
    %s158 = smul.u32 %s157, 2
    %s159 = scalar_lea.vmem %s1, %s158
    %v160 = vld [vmem:[%s159] sm:$0x3]
    %v162 = vlaneseq
    %v163 = vshrl.u32 %v162, 7
    %v164 = vsub.s32 0, %v163
    %v165 = vrot.slane %v100, %v164
    %v166 = vlaneseq
    %v167 = vshrl.u32 %v166, 7
    %v168 = vsub.s32 1, %v167
    %v169 = vrot.slane %v100, %v168
    %v173 = vlaneseq
    %v174 = vshrl.u32 %v173, 7
    %v175 = vsub.s32 0, %v174
    %v176 = vrot.slane %v104, %v175
    %v177 = vlaneseq
    %v178 = vshrl.u32 %v177, 7
    %v179 = vsub.s32 1, %v178
    %v180 = vrot.slane %v104, %v179
    %v184 = vlaneseq
    %v185 = vshrl.u32 %v184, 7
    %v186 = vsub.s32 0, %v185
    %v187 = vrot.slane %v108, %v186
    %v188 = vlaneseq
    %v189 = vshrl.u32 %v188, 7
    %v190 = vsub.s32 1, %v189
    %v191 = vrot.slane %v108, %v190
    %v195 = vlaneseq
    %v196 = vshrl.u32 %v195, 7
    %v197 = vsub.s32 0, %v196
    %v198 = vrot.slane %v112, %v197
    %v199 = vlaneseq
    %v200 = vshrl.u32 %v199, 7
    %v201 = vsub.s32 1, %v200
    %v202 = vrot.slane %v112, %v201
    %v206 = vlaneseq
    %v207 = vshrl.u32 %v206, 7
    %v208 = vsub.s32 0, %v207
    %v209 = vrot.slane %v116, %v208
    %v210 = vlaneseq
    %v211 = vshrl.u32 %v210, 7
    %v212 = vsub.s32 1, %v211
    %v213 = vrot.slane %v116, %v212
    %v217 = vlaneseq
    %v218 = vshrl.u32 %v217, 7
    %v219 = vsub.s32 0, %v218
    %v220 = vrot.slane %v120, %v219
    %v221 = vlaneseq
    %v222 = vshrl.u32 %v221, 7
    %v223 = vsub.s32 1, %v222
    %v224 = vrot.slane %v120, %v223
    %v228 = vlaneseq
    %v229 = vshrl.u32 %v228, 7
    %v230 = vsub.s32 0, %v229
    %v231 = vrot.slane %v124, %v230
    %v232 = vlaneseq
    %v233 = vshrl.u32 %v232, 7
    %v234 = vsub.s32 1, %v233
    %v235 = vrot.slane %v124, %v234
    %v239 = vlaneseq
    %v240 = vshrl.u32 %v239, 7
    %v241 = vsub.s32 0, %v240
    %v242 = vrot.slane %v128, %v241
    %v243 = vlaneseq
    %v244 = vshrl.u32 %v243, 7
    %v245 = vsub.s32 1, %v244
    %v246 = vrot.slane %v128, %v245
    %v250 = vlaneseq
    %v251 = vshrl.u32 %v250, 7
    %v252 = vsub.s32 0, %v251
    %v253 = vrot.slane %v132, %v252
    %v254 = vlaneseq
    %v255 = vshrl.u32 %v254, 7
    %v256 = vsub.s32 1, %v255
    %v257 = vrot.slane %v132, %v256
    %v261 = vlaneseq
    %v262 = vshrl.u32 %v261, 7
    %v263 = vsub.s32 0, %v262
    %v264 = vrot.slane %v136, %v263
    %v265 = vlaneseq
    %v266 = vshrl.u32 %v265, 7
    %v267 = vsub.s32 1, %v266
    %v268 = vrot.slane %v136, %v267
    %v272 = vlaneseq
    %v273 = vshrl.u32 %v272, 7
    %v274 = vsub.s32 0, %v273
    %v275 = vrot.slane %v140, %v274
    %v276 = vlaneseq
    %v277 = vshrl.u32 %v276, 7
    %v278 = vsub.s32 1, %v277
    %v279 = vrot.slane %v140, %v278
    %v283 = vlaneseq
    %v284 = vshrl.u32 %v283, 7
    %v285 = vsub.s32 0, %v284
    %v286 = vrot.slane %v144, %v285
    %v287 = vlaneseq
    %v288 = vshrl.u32 %v287, 7
    %v289 = vsub.s32 1, %v288
    %v290 = vrot.slane %v144, %v289
    %v294 = vlaneseq
    %v295 = vshrl.u32 %v294, 7
    %v296 = vsub.s32 0, %v295
    %v297 = vrot.slane %v148, %v296
    %v298 = vlaneseq
    %v299 = vshrl.u32 %v298, 7
    %v300 = vsub.s32 1, %v299
    %v301 = vrot.slane %v148, %v300
    %v305 = vlaneseq
    %v306 = vshrl.u32 %v305, 7
    %v307 = vsub.s32 0, %v306
    %v308 = vrot.slane %v152, %v307
    %v309 = vlaneseq
    %v310 = vshrl.u32 %v309, 7
    %v311 = vsub.s32 1, %v310
    %v312 = vrot.slane %v152, %v311
    %v316 = vlaneseq
    %v317 = vshrl.u32 %v316, 7
    %v318 = vsub.s32 0, %v317
    %v319 = vrot.slane %v156, %v318
    %v320 = vlaneseq
    %v321 = vshrl.u32 %v320, 7
    %v322 = vsub.s32 1, %v321
    %v323 = vrot.slane %v156, %v322
    %vm326 = vcmask 1040384
    %v327 = vsel %vm326, %v165, %v176
    %v328 = vsel %vm326, %v169, %v180
    %vm329 = vcmask 1041408
    %v330 = vsel %vm329, %v327, %v187
    %v331 = vsel %vm329, %v328, %v191
    %vm332 = vcmask 1042432
    %v333 = vsel %vm332, %v330, %v198
    %v334 = vsel %vm332, %v331, %v202
    %vm335 = vcmask 1043456
    %v336 = vsel %vm335, %v333, %v209
    %v337 = vsel %vm335, %v334, %v213
    %vm338 = vcmask 1044480
    %v339 = vsel %vm338, %v336, %v220
    %v340 = vsel %vm338, %v337, %v224
    %vm341 = vcmask 1045504
    %v342 = vsel %vm341, %v339, %v231
    %v343 = vsel %vm341, %v340, %v235
    %vm344 = vcmask 1046528
    %v345 = vsel %vm344, %v342, %v242
    %v346 = vsel %vm344, %v343, %v246
    %v347 = vsel %vm326, %v253, %v264
    %v348 = vsel %vm326, %v257, %v268
    %v349 = vsel %vm329, %v347, %v275
    %v350 = vsel %vm329, %v348, %v279
    %v351 = vsel %vm332, %v349, %v286
    %v352 = vsel %vm332, %v350, %v290
    %v353 = vsel %vm335, %v351, %v297
    %v354 = vsel %vm335, %v352, %v301
    %v355 = vsel %vm338, %v353, %v308
    %v356 = vsel %vm338, %v354, %v312
    %v357 = vsel %vm341, %v355, %v319
    %v358 = vsel %vm341, %v356, %v323
    %v360 = vlaneseq
    %v361 = vshrl.u32 %v360, 7
    %v362 = vsub.s32 0, %v361
    %v363 = vrot.slane %v160, %v362
    %v364 = vlaneseq
    %v365 = vshrl.u32 %v364, 7
    %v366 = vsub.s32 1, %v365
    %v367 = vrot.slane %v160, %v366
    %v370 = vsel %vm326, %v363, %v90
    %v371 = vsel %vm326, %v367, %v94
    %v374 = vrot.slane %v370, 1
    %v375 = vrot.slane %v371, 1
    %v376 = vrot.slane %v90, 1
    %v377 = vsel %vm344, %v374, %v376
    %v378 = vrot.slane %v94, 1
    %v379 = vsel %vm344, %v375, %v378
    %v384 = vsel %vm344, %v357, %v374
    %v385 = vsel %vm344, %v358, %v375
    %v386 = vpack.c.bf16 %v90, %v345
    %v387 = vpack.c.bf16 %v94, %v346
    %v388 = vpack.c.bf16 %v377, %v384
    %v389 = vpack.c.bf16 %v379, %v385
    %v390 = vld [vmem:[#allocation7] sm:$0xff]
    %v391 = vld [vmem:[#allocation7 + $0x8] sm:$0xff]
    %v392 = vld [vmem:[#allocation7 + $0x10] sm:$0xff]
    %v393 = vld [vmem:[#allocation7 + $0x18] sm:$0xff]
    %v394 = vld [vmem:[#allocation7 + $0x20] sm:$0xff]
    %v395 = vld [vmem:[#allocation7 + $0x28] sm:$0xff]
    %v396 = vld [vmem:[#allocation7 + $0x30] sm:$0xff]
    %v397 = vld [vmem:[#allocation7 + $0x38] sm:$0xff]
    %v398 = vld [vmem:[#allocation7 + $0x40] sm:$0xff]
    %v399 = vld [vmem:[#allocation7 + $0x48] sm:$0xff]
    %v400 = vld [vmem:[#allocation7 + $0x50] sm:$0xff]
    %v401 = vld [vmem:[#allocation7 + $0x58] sm:$0xff]
    %v402 = vld [vmem:[#allocation7 + $0x60] sm:$0xff]
    %v403 = vld [vmem:[#allocation7 + $0x68] sm:$0xff]
    %v404 = vld [vmem:[#allocation7 + $0x70] sm:$0xff]
    %v405 = vld [vmem:[#allocation7 + $0x78] sm:$0xff]
    %v406 = vld [vmem:[#allocation7 + $0x80] sm:$0xff]
    %v407 = vld [vmem:[#allocation7 + $0x88] sm:$0xff]
    %v408 = vld [vmem:[#allocation7 + $0x90] sm:$0xff]
    %v409 = vld [vmem:[#allocation7 + $0x98] sm:$0xff]
    %v410 = vld [vmem:[#allocation7 + $0xa0] sm:$0xff]
    %v411 = vld [vmem:[#allocation7 + $0xa8] sm:$0xff]
    %v412 = vld [vmem:[#allocation7 + $0xb0] sm:$0xff]
    %v413 = vld [vmem:[#allocation7 + $0xb8] sm:$0xff]
    %v414 = vld [vmem:[#allocation7 + $0xc0] sm:$0xff]
    %v415 = vld [vmem:[#allocation7 + $0xc8] sm:$0xff]
    %v416 = vld [vmem:[#allocation7 + $0xd0] sm:$0xff]
    %v417 = vld [vmem:[#allocation7 + $0xd8] sm:$0xff]
    %v418 = vld [vmem:[#allocation7 + $0xe0] sm:$0xff]
    %v419 = vld [vmem:[#allocation7 + $0xe8] sm:$0xff]
    %v420 = vld [vmem:[#allocation7 + $0xf0] sm:$0xff]
    %v421 = vld [vmem:[#allocation7 + $0xf8] sm:$0xff]
    %v422 = vld [vmem:[#allocation7 + $0x100] sm:$0xff]
    %v423 = vld [vmem:[#allocation7 + $0x108] sm:$0xff]
    %v424 = vld [vmem:[#allocation7 + $0x110] sm:$0xff]
    %v425 = vld [vmem:[#allocation7 + $0x118] sm:$0xff]
    %v426 = vld [vmem:[#allocation7 + $0x120] sm:$0xff]
    %v427 = vld [vmem:[#allocation7 + $0x128] sm:$0xff]
    %v428 = vld [vmem:[#allocation7 + $0x130] sm:$0xff]
    %v429 = vld [vmem:[#allocation7 + $0x138] sm:$0xff]
    %v430 = vld [vmem:[#allocation7 + $0x140] sm:$0xff]
    %v431 = vld [vmem:[#allocation7 + $0x148] sm:$0xff]
    %v432 = vld [vmem:[#allocation7 + $0x150] sm:$0xff]
    %v433 = vld [vmem:[#allocation7 + $0x158] sm:$0xff]
    %v434 = vld [vmem:[#allocation7 + $0x160] sm:$0xff]
    %v435 = vld [vmem:[#allocation7 + $0x168] sm:$0xff]
    %v436 = vld [vmem:[#allocation7 + $0x170] sm:$0xff]
    %v437 = vld [vmem:[#allocation7 + $0x178] sm:$0xff]
    %v438 = vld [vmem:[#allocation7 + $0x180] sm:$0xff]
    %v439 = vld [vmem:[#allocation7 + $0x188] sm:$0xff]
    %v440 = vld [vmem:[#allocation7 + $0x190] sm:$0xff]
    %v441 = vld [vmem:[#allocation7 + $0x198] sm:$0xff]
    %v442 = vld [vmem:[#allocation7 + $0x1a0] sm:$0xff]
    %v443 = vld [vmem:[#allocation7 + $0x1a8] sm:$0xff]
    %v444 = vld [vmem:[#allocation7 + $0x1b0] sm:$0xff]
    %v445 = vld [vmem:[#allocation7 + $0x1b8] sm:$0xff]
    %v446 = vld [vmem:[#allocation7 + $0x1c0] sm:$0xff]
    %v447 = vld [vmem:[#allocation7 + $0x1c8] sm:$0xff]
    %v448 = vld [vmem:[#allocation7 + $0x1d0] sm:$0xff]
    %v449 = vld [vmem:[#allocation7 + $0x1d8] sm:$0xff]
    %v450 = vld [vmem:[#allocation7 + $0x1e0] sm:$0xff]
    %v451 = vld [vmem:[#allocation7 + $0x1e8] sm:$0xff]
    %v452 = vld [vmem:[#allocation7 + $0x1f0] sm:$0xff]
    %v453 = vld [vmem:[#allocation7 + $0x1f8] sm:$0xff]
    %v454 = vld [vmem:[#allocation7 + $0x200] sm:$0xff]
    %v455 = vld [vmem:[#allocation7 + $0x208] sm:$0xff]
    %v456 = vld [vmem:[#allocation7 + $0x210] sm:$0xff]
    %v457 = vld [vmem:[#allocation7 + $0x218] sm:$0xff]
    %v458 = vld [vmem:[#allocation7 + $0x220] sm:$0xff]
    %v459 = vld [vmem:[#allocation7 + $0x228] sm:$0xff]
    %v460 = vld [vmem:[#allocation7 + $0x230] sm:$0xff]
    %v461 = vld [vmem:[#allocation7 + $0x238] sm:$0xff]
    %v462 = vld [vmem:[#allocation7 + $0x240] sm:$0xff]
    %v463 = vld [vmem:[#allocation7 + $0x248] sm:$0xff]
    %v464 = vld [vmem:[#allocation7 + $0x250] sm:$0xff]
    %v465 = vld [vmem:[#allocation7 + $0x258] sm:$0xff]
    %v466 = vld [vmem:[#allocation7 + $0x260] sm:$0xff]
    %v467 = vld [vmem:[#allocation7 + $0x268] sm:$0xff]
    %v468 = vld [vmem:[#allocation7 + $0x270] sm:$0xff]
    %v469 = vld [vmem:[#allocation7 + $0x278] sm:$0xff]
    %v470 = vld [vmem:[#allocation7 + $0x280] sm:$0xff]
    %v471 = vld [vmem:[#allocation7 + $0x288] sm:$0xff]
    %v472 = vld [vmem:[#allocation7 + $0x290] sm:$0xff]
    %v473 = vld [vmem:[#allocation7 + $0x298] sm:$0xff]
    %v474 = vld [vmem:[#allocation7 + $0x2a0] sm:$0xff]
    %v475 = vld [vmem:[#allocation7 + $0x2a8] sm:$0xff]
    %v476 = vld [vmem:[#allocation7 + $0x2b0] sm:$0xff]
    %v477 = vld [vmem:[#allocation7 + $0x2b8] sm:$0xff]
    %v478 = vld [vmem:[#allocation7 + $0x2c0] sm:$0xff]
    %v479 = vld [vmem:[#allocation7 + $0x2c8] sm:$0xff]
    %v480 = vld [vmem:[#allocation7 + $0x2d0] sm:$0xff]
    %v481 = vld [vmem:[#allocation7 + $0x2d8] sm:$0xff]
    %v482 = vld [vmem:[#allocation7 + $0x2e0] sm:$0xff]
    %v483 = vld [vmem:[#allocation7 + $0x2e8] sm:$0xff]
    %v484 = vld [vmem:[#allocation7 + $0x2f0] sm:$0xff]
    %v485 = vld [vmem:[#allocation7 + $0x2f8] sm:$0xff]
    %v582 = vunpack.c.l.b16 %v390
    %v583 = vunpack.c.h.b16 %v390
    %v584 = vunpack.c.l.b16 %v391
    %v585 = vunpack.c.h.b16 %v391
    %v586 = vunpack.c.l.b16 %v392
    %v587 = vunpack.c.h.b16 %v392
    %v588 = vunpack.c.l.b16 %v393
    %v589 = vunpack.c.h.b16 %v393
    %v590 = vunpack.c.l.b16 %v394
    %v591 = vunpack.c.h.b16 %v394
    %v592 = vunpack.c.l.b16 %v395
    %v593 = vunpack.c.h.b16 %v395
    %v594 = vunpack.c.l.b16 %v396
    %v595 = vunpack.c.h.b16 %v396
    %v596 = vunpack.c.l.b16 %v397
    %v597 = vunpack.c.h.b16 %v397
    %v598 = vunpack.c.l.b16 %v398
    %v599 = vunpack.c.h.b16 %v398
    %v600 = vunpack.c.l.b16 %v399
    %v601 = vunpack.c.h.b16 %v399
    %v602 = vunpack.c.l.b16 %v400
    %v603 = vunpack.c.h.b16 %v400
    %v604 = vunpack.c.l.b16 %v401
    %v605 = vunpack.c.h.b16 %v401
    %v606 = vunpack.c.l.b16 %v402
    %v607 = vunpack.c.h.b16 %v402
    %v608 = vunpack.c.l.b16 %v403
    %v609 = vunpack.c.h.b16 %v403
    %v610 = vunpack.c.l.b16 %v404
    %v611 = vunpack.c.h.b16 %v404
    %v612 = vunpack.c.l.b16 %v405
    %v613 = vunpack.c.h.b16 %v405
    %v614 = vunpack.c.l.b16 %v406
    %v615 = vunpack.c.h.b16 %v406
    %v616 = vunpack.c.l.b16 %v407
    %v617 = vunpack.c.h.b16 %v407
    %v618 = vunpack.c.l.b16 %v408
    %v619 = vunpack.c.h.b16 %v408
    %v620 = vunpack.c.l.b16 %v409
    %v621 = vunpack.c.h.b16 %v409
    %v622 = vunpack.c.l.b16 %v410
    %v623 = vunpack.c.h.b16 %v410
    %v624 = vunpack.c.l.b16 %v411
    %v625 = vunpack.c.h.b16 %v411
    %v626 = vunpack.c.l.b16 %v412
    %v627 = vunpack.c.h.b16 %v412
    %v628 = vunpack.c.l.b16 %v413
    %v629 = vunpack.c.h.b16 %v413
    %v630 = vunpack.c.l.b16 %v414
    %v631 = vunpack.c.h.b16 %v414
    %v632 = vunpack.c.l.b16 %v415
    %v633 = vunpack.c.h.b16 %v415
    %v634 = vunpack.c.l.b16 %v416
    %v635 = vunpack.c.h.b16 %v416
    %v636 = vunpack.c.l.b16 %v417
    %v637 = vunpack.c.h.b16 %v417
    %v638 = vunpack.c.l.b16 %v418
    %v639 = vunpack.c.h.b16 %v418
    %v640 = vunpack.c.l.b16 %v419
    %v641 = vunpack.c.h.b16 %v419
    %v642 = vunpack.c.l.b16 %v420
    %v643 = vunpack.c.h.b16 %v420
    %v644 = vunpack.c.l.b16 %v421
    %v645 = vunpack.c.h.b16 %v421
    %v646 = vunpack.c.l.b16 %v422
    %v647 = vunpack.c.h.b16 %v422
    %v648 = vunpack.c.l.b16 %v423
    %v649 = vunpack.c.h.b16 %v423
    %v650 = vunpack.c.l.b16 %v424
    %v651 = vunpack.c.h.b16 %v424
    %v652 = vunpack.c.l.b16 %v425
    %v653 = vunpack.c.h.b16 %v425
    %v654 = vunpack.c.l.b16 %v426
    %v655 = vunpack.c.h.b16 %v426
    %v656 = vunpack.c.l.b16 %v427
    %v657 = vunpack.c.h.b16 %v427
    %v658 = vunpack.c.l.b16 %v428
    %v659 = vunpack.c.h.b16 %v428
    %v660 = vunpack.c.l.b16 %v429
    %v661 = vunpack.c.h.b16 %v429
    %v662 = vunpack.c.l.b16 %v430
    %v663 = vunpack.c.h.b16 %v430
    %v664 = vunpack.c.l.b16 %v431
    %v665 = vunpack.c.h.b16 %v431
    %v666 = vunpack.c.l.b16 %v432
    %v667 = vunpack.c.h.b16 %v432
    %v668 = vunpack.c.l.b16 %v433
    %v669 = vunpack.c.h.b16 %v433
    %v670 = vunpack.c.l.b16 %v434
    %v671 = vunpack.c.h.b16 %v434
    %v672 = vunpack.c.l.b16 %v435
    %v673 = vunpack.c.h.b16 %v435
    %v674 = vunpack.c.l.b16 %v436
    %v675 = vunpack.c.h.b16 %v436
    %v676 = vunpack.c.l.b16 %v437
    %v677 = vunpack.c.h.b16 %v437
    %v678 = vunpack.c.l.b16 %v438
    %v679 = vunpack.c.h.b16 %v438
    %v680 = vunpack.c.l.b16 %v439
    %v681 = vunpack.c.h.b16 %v439
    %v682 = vunpack.c.l.b16 %v440
    %v683 = vunpack.c.h.b16 %v440
    %v684 = vunpack.c.l.b16 %v441
    %v685 = vunpack.c.h.b16 %v441
    %v686 = vunpack.c.l.b16 %v442
    %v687 = vunpack.c.h.b16 %v442
    %v688 = vunpack.c.l.b16 %v443
    %v689 = vunpack.c.h.b16 %v443
    %v690 = vunpack.c.l.b16 %v444
    %v691 = vunpack.c.h.b16 %v444
    %v692 = vunpack.c.l.b16 %v445
    %v693 = vunpack.c.h.b16 %v445
    %v694 = vunpack.c.l.b16 %v446
    %v695 = vunpack.c.h.b16 %v446
    %v696 = vunpack.c.l.b16 %v447
    %v697 = vunpack.c.h.b16 %v447
    %v698 = vunpack.c.l.b16 %v448
    %v699 = vunpack.c.h.b16 %v448
    %v700 = vunpack.c.l.b16 %v449
    %v701 = vunpack.c.h.b16 %v449
    %v702 = vunpack.c.l.b16 %v450
    %v703 = vunpack.c.h.b16 %v450
    %v704 = vunpack.c.l.b16 %v451
    %v705 = vunpack.c.h.b16 %v451
    %v706 = vunpack.c.l.b16 %v452
    %v707 = vunpack.c.h.b16 %v452
    %v708 = vunpack.c.l.b16 %v453
    %v709 = vunpack.c.h.b16 %v453
    %v710 = vunpack.c.l.b16 %v454
    %v711 = vunpack.c.h.b16 %v454
    %v712 = vunpack.c.l.b16 %v455
    %v713 = vunpack.c.h.b16 %v455
    %v714 = vunpack.c.l.b16 %v456
    %v715 = vunpack.c.h.b16 %v456
    %v716 = vunpack.c.l.b16 %v457
    %v717 = vunpack.c.h.b16 %v457
    %v718 = vunpack.c.l.b16 %v458
    %v719 = vunpack.c.h.b16 %v458
    %v720 = vunpack.c.l.b16 %v459
    %v721 = vunpack.c.h.b16 %v459
    %v722 = vunpack.c.l.b16 %v460
    %v723 = vunpack.c.h.b16 %v460
    %v724 = vunpack.c.l.b16 %v461
    %v725 = vunpack.c.h.b16 %v461
    %v726 = vunpack.c.l.b16 %v462
    %v727 = vunpack.c.h.b16 %v462
    %v728 = vunpack.c.l.b16 %v463
    %v729 = vunpack.c.h.b16 %v463
    %v730 = vunpack.c.l.b16 %v464
    %v731 = vunpack.c.h.b16 %v464
    %v732 = vunpack.c.l.b16 %v465
    %v733 = vunpack.c.h.b16 %v465
    %v734 = vunpack.c.l.b16 %v466
    %v735 = vunpack.c.h.b16 %v466
    %v736 = vunpack.c.l.b16 %v467
    %v737 = vunpack.c.h.b16 %v467
    %v738 = vunpack.c.l.b16 %v468
    %v739 = vunpack.c.h.b16 %v468
    %v740 = vunpack.c.l.b16 %v469
    %v741 = vunpack.c.h.b16 %v469
    %v742 = vunpack.c.l.b16 %v470
    %v743 = vunpack.c.h.b16 %v470
    %v744 = vunpack.c.l.b16 %v471
    %v745 = vunpack.c.h.b16 %v471
    %v746 = vunpack.c.l.b16 %v472
    %v747 = vunpack.c.h.b16 %v472
    %v748 = vunpack.c.l.b16 %v473
    %v749 = vunpack.c.h.b16 %v473
    %v750 = vunpack.c.l.b16 %v474
    %v751 = vunpack.c.h.b16 %v474
    %v752 = vunpack.c.l.b16 %v475
    %v753 = vunpack.c.h.b16 %v475
    %v754 = vunpack.c.l.b16 %v476
    %v755 = vunpack.c.h.b16 %v476
    %v756 = vunpack.c.l.b16 %v477
    %v757 = vunpack.c.h.b16 %v477
    %v758 = vunpack.c.l.b16 %v478
    %v759 = vunpack.c.h.b16 %v478
    %v760 = vunpack.c.l.b16 %v479
    %v761 = vunpack.c.h.b16 %v479
    %v762 = vunpack.c.l.b16 %v480
    %v763 = vunpack.c.h.b16 %v480
    %v764 = vunpack.c.l.b16 %v481
    %v765 = vunpack.c.h.b16 %v481
    %v766 = vunpack.c.l.b16 %v482
    %v767 = vunpack.c.h.b16 %v482
    %v768 = vunpack.c.l.b16 %v483
    %v769 = vunpack.c.h.b16 %v483
    %v770 = vunpack.c.l.b16 %v484
    %v771 = vunpack.c.h.b16 %v484
    %v772 = vunpack.c.l.b16 %v485
    %v773 = vunpack.c.h.b16 %v485
    %v774 = vpack.c.b16 %v588, %v582
    %v775 = vpack.c.b16 %v589, %v583
    %v776 = vpack.c.b16 %v590, %v584
    %v777 = vpack.c.b16 %v591, %v585
    %v778 = vpack.c.b16 %v592, %v586
    %v779 = vpack.c.b16 %v593, %v587
    %v780 = vpack.c.b16 %v600, %v594
    %v781 = vpack.c.b16 %v601, %v595
    %v782 = vpack.c.b16 %v602, %v596
    %v783 = vpack.c.b16 %v603, %v597
    %v784 = vpack.c.b16 %v604, %v598
    %v785 = vpack.c.b16 %v605, %v599
    %v786 = vpack.c.b16 %v612, %v606
    %v787 = vpack.c.b16 %v613, %v607
    %v788 = vpack.c.b16 %v614, %v608
    %v789 = vpack.c.b16 %v615, %v609
    %v790 = vpack.c.b16 %v616, %v610
    %v791 = vpack.c.b16 %v617, %v611
    %v792 = vpack.c.b16 %v624, %v618
    %v793 = vpack.c.b16 %v625, %v619
    %v794 = vpack.c.b16 %v626, %v620
    %v795 = vpack.c.b16 %v627, %v621
    %v796 = vpack.c.b16 %v628, %v622
    %v797 = vpack.c.b16 %v629, %v623
    %v798 = vpack.c.b16 %v636, %v630
    %v799 = vpack.c.b16 %v637, %v631
    %v800 = vpack.c.b16 %v638, %v632
    %v801 = vpack.c.b16 %v639, %v633
    %v802 = vpack.c.b16 %v640, %v634
    %v803 = vpack.c.b16 %v641, %v635
    %v804 = vpack.c.b16 %v648, %v642
    %v805 = vpack.c.b16 %v649, %v643
    %v806 = vpack.c.b16 %v650, %v644
    %v807 = vpack.c.b16 %v651, %v645
    %v808 = vpack.c.b16 %v652, %v646
    %v809 = vpack.c.b16 %v653, %v647
    %v810 = vpack.c.b16 %v660, %v654
    %v811 = vpack.c.b16 %v661, %v655
    %v812 = vpack.c.b16 %v662, %v656
    %v813 = vpack.c.b16 %v663, %v657
    %v814 = vpack.c.b16 %v664, %v658
    %v815 = vpack.c.b16 %v665, %v659
    %v816 = vpack.c.b16 %v672, %v666
    %v817 = vpack.c.b16 %v673, %v667
    %v818 = vpack.c.b16 %v674, %v668
    %v819 = vpack.c.b16 %v675, %v669
    %v820 = vpack.c.b16 %v676, %v670
    %v821 = vpack.c.b16 %v677, %v671
    %v822 = vpack.c.b16 %v684, %v678
    %v823 = vpack.c.b16 %v685, %v679
    %v824 = vpack.c.b16 %v686, %v680
    %v825 = vpack.c.b16 %v687, %v681
    %v826 = vpack.c.b16 %v688, %v682
    %v827 = vpack.c.b16 %v689, %v683
    %v828 = vpack.c.b16 %v696, %v690
    %v829 = vpack.c.b16 %v697, %v691
    %v830 = vpack.c.b16 %v698, %v692
    %v831 = vpack.c.b16 %v699, %v693
    %v832 = vpack.c.b16 %v700, %v694
    %v833 = vpack.c.b16 %v701, %v695
    %v834 = vpack.c.b16 %v708, %v702
    %v835 = vpack.c.b16 %v709, %v703
    %v836 = vpack.c.b16 %v710, %v704
    %v837 = vpack.c.b16 %v711, %v705
    %v838 = vpack.c.b16 %v712, %v706
    %v839 = vpack.c.b16 %v713, %v707
    %v840 = vpack.c.b16 %v720, %v714
    %v841 = vpack.c.b16 %v721, %v715
    %v842 = vpack.c.b16 %v722, %v716
    %v843 = vpack.c.b16 %v723, %v717
    %v844 = vpack.c.b16 %v724, %v718
    %v845 = vpack.c.b16 %v725, %v719
    %v846 = vpack.c.b16 %v732, %v726
    %v847 = vpack.c.b16 %v733, %v727
    %v848 = vpack.c.b16 %v734, %v728
    %v849 = vpack.c.b16 %v735, %v729
    %v850 = vpack.c.b16 %v736, %v730
    %v851 = vpack.c.b16 %v737, %v731
    %v852 = vpack.c.b16 %v744, %v738
    %v853 = vpack.c.b16 %v745, %v739
    %v854 = vpack.c.b16 %v746, %v740
    %v855 = vpack.c.b16 %v747, %v741
    %v856 = vpack.c.b16 %v748, %v742
    %v857 = vpack.c.b16 %v749, %v743
    %v858 = vpack.c.b16 %v756, %v750
    %v859 = vpack.c.b16 %v757, %v751
    %v860 = vpack.c.b16 %v758, %v752
    %v861 = vpack.c.b16 %v759, %v753
    %v862 = vpack.c.b16 %v760, %v754
    %v863 = vpack.c.b16 %v761, %v755
    %v864 = vpack.c.b16 %v768, %v762
    %v865 = vpack.c.b16 %v769, %v763
    %v866 = vpack.c.b16 %v770, %v764
    %v867 = vpack.c.b16 %v771, %v765
    %v868 = vpack.c.b16 %v772, %v766
    %v869 = vpack.c.b16 %v773, %v767
    %966 = vmatprep.subr.bf16.mxu0 %v775
    %967 = vmatpush1.bf16.msra.mxu0 %v774
    %968 = vmatprep.subr.bf16.mxu0 %v781
    %969 = vmatpush1.bf16.msra.mxu0 %v780
    %970 = vmatprep.subr.bf16.mxu0 %v787
    %971 = vmatpush1.bf16.msra.mxu0 %v786
    %972 = vmatprep.subr.bf16.mxu0 %v793
    %973 = vmatpush1.bf16.msra.mxu0 %v792
    %974 = vmatprep.subr.bf16.mxu0 %v799
    %975 = vmatpush1.bf16.msra.mxu0 %v798
    %976 = vmatprep.subr.bf16.mxu0 %v805
    %977 = vmatpush1.bf16.msra.mxu0 %v804
    %978 = vmatprep.subr.bf16.mxu0 %v811
    %979 = vmatpush1.bf16.msra.mxu0 %v810
    %980 = vmatprep.subr.bf16.mxu0 %v817
    %981 = vmatpush1.bf16.msra.mxu0 %v816
    %982 = vmatprep.subr.bf16.mxu0 %v823
    %983 = vmatpush1.bf16.msra.mxu0 %v822
    %984 = vmatprep.subr.bf16.mxu0 %v829
    %985 = vmatpush1.bf16.msra.mxu0 %v828
    %986 = vmatprep.subr.bf16.mxu0 %v835
    %987 = vmatpush1.bf16.msra.mxu0 %v834
    %988 = vmatprep.subr.bf16.mxu0 %v841
    %989 = vmatpush1.bf16.msra.mxu0 %v840
    %990 = vmatprep.subr.bf16.mxu0 %v847
    %991 = vmatpush1.bf16.msra.mxu0 %v846
    %992 = vmatprep.subr.bf16.mxu0 %v853
    %993 = vmatpush1.bf16.msra.mxu0 %v852
    %994 = vmatprep.subr.bf16.mxu0 %v859
    %995 = vmatpush1.bf16.msra.mxu0 %v858
    %996 = vmatprep.subr.bf16.mxu0 %v865
    %997 = vmatpush1.bf16.msra.mxu0 %v864
    %998 = vmatprep.mubr.bf16.mxu0 %v387
    %999 = vmatmul.mubr.bf16.gmra.mrb[0].mxu0 %v386
    %v1000 = vpop.f32.mrb[0].mxu0
    %v1001 = vadd.f32 0.0, %v1000
    %v1002 = vpop.f32.mrb[0].mxu0
    %v1003 = vadd.f32 0.0, %v1002
    %v1004 = vpop.f32.mrb[0].mxu0
    %v1005 = vadd.f32 0.0, %v1004
    %v1006 = vpop.f32.mrb[0].mxu0
    %v1007 = vadd.f32 0.0, %v1006
    %1008 = vmatprep.mubr.bf16.mxu0 %v389
    %1009 = vmatmul.mubr.bf16.gmra.mrb[0].mxu0 %v388
    %v1010 = vpop.f32.mrb[0].mxu0
    %v1011 = vadd.f32 0.0, %v1010
    %v1012 = vpop.f32.mrb[0].mxu0
    %v1013 = vadd.f32 0.0, %v1012
    %v1014 = vpop.f32.mrb[0].mxu0
    %v1015 = vadd.f32 0.0, %v1014
    %v1016 = vpop.f32.mrb[0].mxu0
    %v1017 = vadd.f32 0.0, %v1016
    %1018 = vdwg.mxu0
    %1019 = vmatprep.subr.bf16.mxu0 %v777
    %1020 = vmatpush1.bf16.msra.mxu0 %v776
    %1021 = vmatprep.subr.bf16.mxu0 %v783
    %1022 = vmatpush1.bf16.msra.mxu0 %v782
    %1023 = vmatprep.subr.bf16.mxu0 %v789
    %1024 = vmatpush1.bf16.msra.mxu0 %v788
    %1025 = vmatprep.subr.bf16.mxu0 %v795
    %1026 = vmatpush1.bf16.msra.mxu0 %v794
    %1027 = vmatprep.subr.bf16.mxu0 %v801
    %1028 = vmatpush1.bf16.msra.mxu0 %v800
    %1029 = vmatprep.subr.bf16.mxu0 %v807
    %1030 = vmatpush1.bf16.msra.mxu0 %v806
    %1031 = vmatprep.subr.bf16.mxu0 %v813
    %1032 = vmatpush1.bf16.msra.mxu0 %v812
    %1033 = vmatprep.subr.bf16.mxu0 %v819
    %1034 = vmatpush1.bf16.msra.mxu0 %v818
    %1035 = vmatprep.subr.bf16.mxu0 %v825
    %1036 = vmatpush1.bf16.msra.mxu0 %v824
    %1037 = vmatprep.subr.bf16.mxu0 %v831
    %1038 = vmatpush1.bf16.msra.mxu0 %v830
    %1039 = vmatprep.subr.bf16.mxu0 %v837
    %1040 = vmatpush1.bf16.msra.mxu0 %v836
    %1041 = vmatprep.subr.bf16.mxu0 %v843
    %1042 = vmatpush1.bf16.msra.mxu0 %v842
    %1043 = vmatprep.subr.bf16.mxu0 %v849
    %1044 = vmatpush1.bf16.msra.mxu0 %v848
    %1045 = vmatprep.subr.bf16.mxu0 %v855
    %1046 = vmatpush1.bf16.msra.mxu0 %v854
    %1047 = vmatprep.subr.bf16.mxu0 %v861
    %1048 = vmatpush1.bf16.msra.mxu0 %v860
    %1049 = vmatprep.subr.bf16.mxu0 %v867
    %1050 = vmatpush1.bf16.msra.mxu0 %v866
    %1051 = vmatprep.mubr.bf16.mxu0 %v387
    %1052 = vmatmul.mubr.bf16.gmra.mrb[0].mxu0 %v386
    %v1053 = vpop.f32.mrb[0].mxu0
    %v1054 = vadd.f32 0.0, %v1053
    %v1055 = vpop.f32.mrb[0].mxu0
    %v1056 = vadd.f32 0.0, %v1055
    %v1057 = vpop.f32.mrb[0].mxu0
    %v1058 = vadd.f32 0.0, %v1057
    %v1059 = vpop.f32.mrb[0].mxu0
    %v1060 = vadd.f32 0.0, %v1059
    %1061 = vmatprep.mubr.bf16.mxu0 %v389
    %1062 = vmatmul.mubr.bf16.gmra.mrb[0].mxu0 %v388
    %v1063 = vpop.f32.mrb[0].mxu0
    %v1064 = vadd.f32 0.0, %v1063
    %v1065 = vpop.f32.mrb[0].mxu0
    %v1066 = vadd.f32 0.0, %v1065
    %v1067 = vpop.f32.mrb[0].mxu0
    %v1068 = vadd.f32 0.0, %v1067
    %v1069 = vpop.f32.mrb[0].mxu0
    %v1070 = vadd.f32 0.0, %v1069
    %1071 = vdwg.mxu0
    %1072 = vmatprep.subr.bf16.mxu0 %v779
    %1073 = vmatpush1.bf16.msra.mxu0 %v778
    %1074 = vmatprep.subr.bf16.mxu0 %v785
    %1075 = vmatpush1.bf16.msra.mxu0 %v784
    %1076 = vmatprep.subr.bf16.mxu0 %v791
    %1077 = vmatpush1.bf16.msra.mxu0 %v790
    %1078 = vmatprep.subr.bf16.mxu0 %v797
    %1079 = vmatpush1.bf16.msra.mxu0 %v796
    %1080 = vmatprep.subr.bf16.mxu0 %v803
    %1081 = vmatpush1.bf16.msra.mxu0 %v802
    %1082 = vmatprep.subr.bf16.mxu0 %v809
    %1083 = vmatpush1.bf16.msra.mxu0 %v808
    %1084 = vmatprep.subr.bf16.mxu0 %v815
    %1085 = vmatpush1.bf16.msra.mxu0 %v814
    %1086 = vmatprep.subr.bf16.mxu0 %v821
    %1087 = vmatpush1.bf16.msra.mxu0 %v820
    %1088 = vmatprep.subr.bf16.mxu0 %v827
    %1089 = vmatpush1.bf16.msra.mxu0 %v826
    %1090 = vmatprep.subr.bf16.mxu0 %v833
    %1091 = vmatpush1.bf16.msra.mxu0 %v832
    %1092 = vmatprep.subr.bf16.mxu0 %v839
    %1093 = vmatpush1.bf16.msra.mxu0 %v838
    %1094 = vmatprep.subr.bf16.mxu0 %v845
    %1095 = vmatpush1.bf16.msra.mxu0 %v844
    %1096 = vmatprep.subr.bf16.mxu0 %v851
    %1097 = vmatpush1.bf16.msra.mxu0 %v850
    %1098 = vmatprep.subr.bf16.mxu0 %v857
    %1099 = vmatpush1.bf16.msra.mxu0 %v856
    %1100 = vmatprep.subr.bf16.mxu0 %v863
    %1101 = vmatpush1.bf16.msra.mxu0 %v862
    %1102 = vmatprep.subr.bf16.mxu0 %v869
    %1103 = vmatpush1.bf16.msra.mxu0 %v868
    %1104 = vmatprep.mubr.bf16.mxu0 %v387
    %1105 = vmatmul.mubr.bf16.gmra.mrb[0].mxu0 %v386
    %v1106 = vpop.f32.mrb[0].mxu0
    %v1107 = vadd.f32 0.0, %v1106
    %v1108 = vpop.f32.mrb[0].mxu0
    %v1109 = vadd.f32 0.0, %v1108
    %v1110 = vpop.f32.mrb[0].mxu0
    %v1111 = vadd.f32 0.0, %v1110
    %v1112 = vpop.f32.mrb[0].mxu0
    %v1113 = vadd.f32 0.0, %v1112
    %1114 = vmatprep.mubr.bf16.mxu0 %v389
    %1115 = vmatmul.mubr.bf16.gmra.mrb[0].mxu0 %v388
    %v1116 = vpop.f32.mrb[0].mxu0
    %v1117 = vadd.f32 0.0, %v1116
    %v1118 = vpop.f32.mrb[0].mxu0
    %v1119 = vadd.f32 0.0, %v1118
    %v1120 = vpop.f32.mrb[0].mxu0
    %v1121 = vadd.f32 0.0, %v1120
    %v1122 = vpop.f32.mrb[0].mxu0
    %v1123 = vadd.f32 0.0, %v1122
    %1124 = vdwg.mxu0
    %1125 = vst [vmem:[#allocation2] sm:$0xff] %v1001
    %1126 = vst [vmem:[#allocation2 + $0x8] sm:$0xff] %v1003
    %1127 = vst [vmem:[#allocation2 + $0x10] sm:$0xff] %v1054
    %1128 = vst [vmem:[#allocation2 + $0x18] sm:$0xff] %v1056
    %1129 = vst [vmem:[#allocation2 + $0x20] sm:$0xff] %v1107
    %1130 = vst [vmem:[#allocation2 + $0x28] sm:$0xff] %v1109
    %1131 = vst [vmem:[#allocation2 + $0x30] sm:$0xff] %v1005
    %1132 = vst [vmem:[#allocation2 + $0x38] sm:$0xff] %v1007
    %1133 = vst [vmem:[#allocation2 + $0x40] sm:$0xff] %v1058
    %1134 = vst [vmem:[#allocation2 + $0x48] sm:$0xff] %v1060
    %1135 = vst [vmem:[#allocation2 + $0x50] sm:$0xff] %v1111
    %1136 = vst [vmem:[#allocation2 + $0x58] sm:$0xff] %v1113
    %1137 = vst [vmem:[#allocation2 + $0x60] sm:$0xff] %v1011
    %1138 = vst [vmem:[#allocation2 + $0x68] sm:$0xff] %v1013
    %1139 = vst [vmem:[#allocation2 + $0x70] sm:$0xff] %v1064
    %1140 = vst [vmem:[#allocation2 + $0x78] sm:$0xff] %v1066
    %1141 = vst [vmem:[#allocation2 + $0x80] sm:$0xff] %v1117
    %1142 = vst [vmem:[#allocation2 + $0x88] sm:$0xff] %v1119
    %1143 = vst [vmem:[#allocation2 + $0x90] sm:$0xff] %v1015
    %1144 = vst [vmem:[#allocation2 + $0x98] sm:$0xff] %v1017
    %1145 = vst [vmem:[#allocation2 + $0xa0] sm:$0xff] %v1068
    %1146 = vst [vmem:[#allocation2 + $0xa8] sm:$0xff] %v1070
    %1147 = vst [vmem:[#allocation2 + $0xb0] sm:$0xff] %v1121
    %1148 = vst [vmem:[#allocation2 + $0xb8] sm:$0xff] %v1123
    %v1149 = vld [vmem:[%s5] sm:$0xff]
    %v1150 = vld [vmem:[%s5 + $0x8] sm:$0xff]
    %v1151 = vld [vmem:[#allocation8] sm:$0xff]
    %v1152 = vld [vmem:[#allocation8 + $0x8] sm:$0xff]
    %v1153 = vld [vmem:[#allocation10] sm:$0xff]
    %v1154 = vld [vmem:[#allocation10 + $0x8] sm:$0xff]
    %v1155 = vld [vmem:[#allocation10 + $0x10] sm:$0xff]
    %v1156 = vld [vmem:[#allocation10 + $0x18] sm:$0xff]
    %v1157 = vld [vmem:[#allocation2] sm:$0xff]
    %v1158 = vld [vmem:[#allocation2 + $0x30] sm:$0xff]
    %v1159 = vld [vmem:[#allocation2 + $0x60] sm:$0xff]
    %v1160 = vld [vmem:[#allocation2 + $0x90] sm:$0xff]
    %v1161 = vmul.f32 %v1157, %v1149
    %v1162 = vmul.f32 %v1158, %v1150
    %v1163 = vmul.f32 %v1159, %v1149
    %v1164 = vmul.f32 %v1160, %v1150
    %1165 = vrot.lane.b32.xlu0 %v1157, 64
    %v1166 = vpop.permute.xlu0 %1165
    %1167 = vrot.lane.b32.xlu0 %v1158, 64
    %v1168 = vpop.permute.xlu0 %1167
    %1169 = vrot.lane.b32.xlu0 %v1159, 64
    %v1170 = vpop.permute.xlu0 %1169
    %1171 = vrot.lane.b32.xlu0 %v1160, 64
    %v1172 = vpop.permute.xlu0 %1171
    %v1173 = vmul.f32 %v1166, %v1151
    %v1174 = vmul.f32 %v1168, %v1152
    %v1175 = vmul.f32 %v1170, %v1151
    %v1176 = vmul.f32 %v1172, %v1152
    %v1177 = vadd.f32 %v1161, %v1173
    %v1178 = vadd.f32 %v1162, %v1174
    %v1179 = vadd.f32 %v1163, %v1175
    %v1180 = vadd.f32 %v1164, %v1176
    %v1181 = vpack.c.bf16 %v1178, %v1177
    %v1182 = vpack.c.bf16 %v1180, %v1179
    %v1183 = vld [vmem:[#allocation2 + $0x10] sm:$0xff]
    %v1184 = vld [vmem:[#allocation2 + $0x40] sm:$0xff]
    %v1185 = vld [vmem:[#allocation2 + $0x70] sm:$0xff]
    %v1186 = vld [vmem:[#allocation2 + $0xa0] sm:$0xff]
    %v1187 = vmul.f32 %v1183, %v1149
    %v1188 = vmul.f32 %v1184, %v1150
    %v1189 = vmul.f32 %v1185, %v1149
    %v1190 = vmul.f32 %v1186, %v1150
    %1191 = vrot.lane.b32.xlu0 %v1183, 64
    %v1192 = vpop.permute.xlu0 %1191
    %1193 = vrot.lane.b32.xlu0 %v1184, 64
    %v1194 = vpop.permute.xlu0 %1193
    %1195 = vrot.lane.b32.xlu0 %v1185, 64
    %v1196 = vpop.permute.xlu0 %1195
    %1197 = vrot.lane.b32.xlu0 %v1186, 64
    %v1198 = vpop.permute.xlu0 %1197
    %v1199 = vmul.f32 %v1192, %v1151
    %v1200 = vmul.f32 %v1194, %v1152
    %v1201 = vmul.f32 %v1196, %v1151
    %v1202 = vmul.f32 %v1198, %v1152
    %v1203 = vadd.f32 %v1187, %v1199
    %v1204 = vadd.f32 %v1188, %v1200
    %v1205 = vadd.f32 %v1189, %v1201
    %v1206 = vadd.f32 %v1190, %v1202
    %v1207 = vpack.c.bf16 %v1204, %v1203
    %v1208 = vpack.c.bf16 %v1206, %v1205
    %v1209 = vld [vmem:[#allocation2 + $0x20] sm:$0xff]
    %v1210 = vld [vmem:[#allocation2 + $0x50] sm:$0xff]
    %v1211 = vld [vmem:[#allocation2 + $0x80] sm:$0xff]
    %v1212 = vld [vmem:[#allocation2 + $0xb0] sm:$0xff]
    %v1213 = vpack.c.bf16 %v1210, %v1209
    %v1214 = vpack.c.bf16 %v1212, %v1211
    %1215 = vmatprep.subr.bf16.mxu0 0
    %1216 = vmatpush1.bf16.xpose.msra.mxu0 %v1207
    %1217 = vmatprep.subr.bf16.mxu0 0
    %1218 = vmatpush1.bf16.xpose.msra.mxu0 %v1208
    %1219 = vmatprep.subr.bf16.mxu0 0
    %1220 = vmatpush1.bf16.xpose.msra.mxu0 0
    %1221 = vmatprep.subr.bf16.mxu0 0
    %1222 = vmatpush1.bf16.xpose.msra.mxu0 0
    %1223 = vmatprep.subr.bf16.mxu0 0
    %1224 = vmatpush1.bf16.xpose.msra.mxu0 0
    %1225 = vmatprep.subr.bf16.mxu0 0
    %1226 = vmatpush1.bf16.xpose.msra.mxu0 0
    %1227 = vmatprep.subr.bf16.mxu0 0
    %1228 = vmatpush1.bf16.xpose.msra.mxu0 0
    %1229 = vmatprep.subr.bf16.mxu0 0
    %1230 = vmatpush1.bf16.xpose.msra.mxu0 0
    %1231 = vmatprep.subr.bf16.mxu0 0
    %1232 = vmatpush1.bf16.xpose.msra.mxu0 0
    %1233 = vmatprep.subr.bf16.mxu0 0
    %1234 = vmatpush1.bf16.xpose.msra.mxu0 0
    %1235 = vmatprep.subr.bf16.mxu0 0
    %1236 = vmatpush1.bf16.xpose.msra.mxu0 0
    %1237 = vmatprep.subr.bf16.mxu0 0
    %1238 = vmatpush1.bf16.xpose.msra.mxu0 0
    %1239 = vmatprep.subr.bf16.mxu0 0
    %1240 = vmatpush1.bf16.xpose.msra.mxu0 0
    %1241 = vmatprep.subr.bf16.mxu0 0
    %1242 = vmatpush1.bf16.xpose.msra.mxu0 0
    %1243 = vmatprep.subr.bf16.mxu0 0
    %1244 = vmatpush1.bf16.xpose.msra.mxu0 0
    %1245 = vmatprep.subr.bf16.mxu0 0
    %1246 = vmatpush1.bf16.xpose.msra.mxu0 0
    %1247 = vmatprep.mubr.bf16.mxu0 0
    %1248 = vmatmul.mubr.bf16.gmra.mrb[0].mxu0 %v1181
    %v1249 = vpop.f32.mrb[0].mxu0
    %v1250 = vadd.f32 %v1153, %v1249
    %v1251 = vpop.f32.mrb[0].mxu0
    %v1252 = vpop.f32.mrb[0].mxu0
    %v1253 = vadd.f32 %v1154, %v1252
    %v1254 = vpop.f32.mrb[0].mxu0
    %1255 = vmatprep.mubr.bf16.mxu0 0
    %1256 = vmatmul.mubr.bf16.gmra.mrb[0].mxu0 %v1182
    %v1257 = vpop.f32.mrb[0].mxu0
    %v1258 = vadd.f32 %v1155, %v1257
    %v1259 = vpop.f32.mrb[0].mxu0
    %v1260 = vpop.f32.mrb[0].mxu0
    %v1261 = vadd.f32 %v1156, %v1260
    %v1262 = vpop.f32.mrb[0].mxu0
    %1263 = vdwg.mxu0
    %vm1264 = vcmask 261120
    %v1265 = vsel %vm1264, %v1250, -inf
    %1266 = vmax.xlane.f32.xlu0 %v1265
    %v1267 = vpop.xlane.xlu0 %1266
    %v1268 = vsel %vm1264, %v1253, -inf
    %1269 = vmax.xlane.f32.xlu0 %v1268
    %v1270 = vpop.xlane.xlu0 %1269
    %v1271 = vsel %vm1264, %v1258, -inf
    %1272 = vmax.xlane.f32.xlu0 %v1271
    %v1273 = vpop.xlane.xlu0 %1272
    %v1274 = vsel %vm1264, %v1261, -inf
    %1275 = vmax.xlane.f32.xlu0 %v1274
    %v1276 = vpop.xlane.xlu0 %1275
    %v1277 = vsub.f32 %v1250, %v1267
    %v1278 = vsub.f32 %v1253, %v1270
    %v1279 = vsub.f32 %v1258, %v1273
    %v1280 = vsub.f32 %v1261, %v1276
    %v1281 = vmul.f32 %v1277, 1.442695
    %v1282 = vpow.pop %v1281
    %v1283 = vmul.f32 %v1278, 1.442695
    %v1284 = vpow.pop %v1283
    %v1285 = vmul.f32 %v1279, 1.442695
    %v1286 = vpow.pop %v1285
    %v1287 = vmul.f32 %v1280, 1.442695
    %v1288 = vpow.pop %v1287
    %v1289 = vsel %vm1264, %v1282, 0.0
    %1290 = vadd.xlane.f32.xlu0 %v1289
    %v1291 = vpop.xlane.xlu0 %1290
    %v1292 = vsel %vm1264, %v1284, 0.0
    %1293 = vadd.xlane.f32.xlu0 %v1292
    %v1294 = vpop.xlane.xlu0 %1293
    %v1295 = vsel %vm1264, %v1286, 0.0
    %1296 = vadd.xlane.f32.xlu0 %v1295
    %v1297 = vpop.xlane.xlu0 %1296
    %v1298 = vsel %vm1264, %v1288, 0.0
    %1299 = vadd.xlane.f32.xlu0 %v1298
    %v1300 = vpop.xlane.xlu0 %1299
    %v1301 = vpack.c.bf16 %v1284, %v1282
    %v1302 = vpack.c.bf16 %v1288, %v1286
    %v1304 = vsel %vm1264, %v1301, 0
    %v1307 = vsel %vm1264, %v1302, 0
    %1309 = vmatprep.subr.bf16.mxu0 0
    %1310 = vmatpush1.bf16.msra.mxu0 %v1213
    %1311 = vmatprep.subr.bf16.mxu0 0
    %1312 = vmatpush1.bf16.msra.mxu0 %v1214
    %1313 = vmatprep.subr.bf16.mxu0 0
    %1314 = vmatpush1.bf16.msra.mxu0 0
    %1315 = vmatprep.subr.bf16.mxu0 0
    %1316 = vmatpush1.bf16.msra.mxu0 0
    %1317 = vmatprep.subr.bf16.mxu0 0
    %1318 = vmatpush1.bf16.msra.mxu0 0
    %1319 = vmatprep.subr.bf16.mxu0 0
    %1320 = vmatpush1.bf16.msra.mxu0 0
    %1321 = vmatprep.subr.bf16.mxu0 0
    %1322 = vmatpush1.bf16.msra.mxu0 0
    %1323 = vmatprep.subr.bf16.mxu0 0
    %1324 = vmatpush1.bf16.msra.mxu0 0
    %1325 = vmatprep.subr.bf16.mxu0 0
    %1326 = vmatpush1.bf16.msra.mxu0 0
    %1327 = vmatprep.subr.bf16.mxu0 0
    %1328 = vmatpush1.bf16.msra.mxu0 0
    %1329 = vmatprep.subr.bf16.mxu0 0
    %1330 = vmatpush1.bf16.msra.mxu0 0
    %1331 = vmatprep.subr.bf16.mxu0 0
    %1332 = vmatpush1.bf16.msra.mxu0 0
    %1333 = vmatprep.subr.bf16.mxu0 0
    %1334 = vmatpush1.bf16.msra.mxu0 0
    %1335 = vmatprep.subr.bf16.mxu0 0
    %1336 = vmatpush1.bf16.msra.mxu0 0
    %1337 = vmatprep.subr.bf16.mxu0 0
    %1338 = vmatpush1.bf16.msra.mxu0 0
    %1339 = vmatprep.subr.bf16.mxu0 0
    %1340 = vmatpush1.bf16.msra.mxu0 0
    %1341 = vmatprep.mubr.bf16.mxu0 0
    %1342 = vmatmul.mubr.bf16.gmra.mrb[0].mxu0 %v1304
    %v1343 = vpop.f32.mrb[0].mxu0
    %v1344 = vadd.f32 0.0, %v1343
    %v1345 = vpop.f32.mrb[0].mxu0
    %v1346 = vpop.f32.mrb[0].mxu0
    %v1347 = vadd.f32 0.0, %v1346
    %v1348 = vpop.f32.mrb[0].mxu0
    %1349 = vmatprep.mubr.bf16.mxu0 0
    %1350 = vmatmul.mubr.bf16.gmra.mrb[0].mxu0 %v1307
    %v1351 = vpop.f32.mrb[0].mxu0
    %v1352 = vadd.f32 0.0, %v1351
    %v1353 = vpop.f32.mrb[0].mxu0
    %v1354 = vpop.f32.mrb[0].mxu0
    %v1355 = vadd.f32 0.0, %v1354
    %v1356 = vpop.f32.mrb[0].mxu0
    %1357 = vdwg.mxu0
    %v1358 = vrcp.pop %v1291
    %v1359 = vrcp.pop %v1294
    %v1360 = vrcp.pop %v1297
    %v1361 = vrcp.pop %v1300
    %v1362 = vmul.f32 %v1344, %v1358
    %v1363 = vmul.f32 %v1347, %v1359
    %v1364 = vmul.f32 %v1352, %v1360
    %v1365 = vmul.f32 %v1355, %v1361
    %v1366 = vpack.c.bf16 %v1363, %v1362
    %v1367 = vpack.c.bf16 %v1365, %v1364
    %v1368 = vld [vmem:[%s4] sm:$0xff]
    %v1369 = vld [vmem:[%s4 + $0x8] sm:$0xff]
    %v1370 = vld [vmem:[%s4 + $0x10] sm:$0xff]
    %v1371 = vld [vmem:[%s4 + $0x18] sm:$0xff]
    %v1372 = vld [vmem:[%s4 + $0x20] sm:$0xff]
    %v1373 = vld [vmem:[%s4 + $0x28] sm:$0xff]
    %v1374 = vld [vmem:[%s4 + $0x30] sm:$0xff]
    %v1375 = vld [vmem:[%s4 + $0x38] sm:$0xff]
    %v1376 = vld [vmem:[%s4 + $0x40] sm:$0xff]
    %v1377 = vld [vmem:[%s4 + $0x48] sm:$0xff]
    %v1378 = vld [vmem:[%s4 + $0x50] sm:$0xff]
    %v1379 = vld [vmem:[%s4 + $0x58] sm:$0xff]
    %v1380 = vld [vmem:[%s4 + $0x60] sm:$0xff]
    %v1381 = vld [vmem:[%s4 + $0x68] sm:$0xff]
    %v1382 = vld [vmem:[%s4 + $0x70] sm:$0xff]
    %v1383 = vld [vmem:[%s4 + $0x78] sm:$0xff]
    %v1384 = vld [vmem:[#allocation2 + $0x8] sm:$0xff]
    %v1385 = vld [vmem:[#allocation2 + $0x38] sm:$0xff]
    %v1386 = vld [vmem:[#allocation2 + $0x68] sm:$0xff]
    %v1387 = vld [vmem:[#allocation2 + $0x98] sm:$0xff]
    %v1388 = vmul.f32 %v1384, %v1149
    %v1389 = vmul.f32 %v1385, %v1150
    %v1390 = vmul.f32 %v1386, %v1149
    %v1391 = vmul.f32 %v1387, %v1150
    %1392 = vrot.lane.b32.xlu0 %v1384, 64
    %v1393 = vpop.permute.xlu0 %1392
    %1394 = vrot.lane.b32.xlu0 %v1385, 64
    %v1395 = vpop.permute.xlu0 %1394
    %1396 = vrot.lane.b32.xlu0 %v1386, 64
    %v1397 = vpop.permute.xlu0 %1396
    %1398 = vrot.lane.b32.xlu0 %v1387, 64
    %v1399 = vpop.permute.xlu0 %1398
    %v1400 = vmul.f32 %v1393, %v1151
    %v1401 = vmul.f32 %v1395, %v1152
    %v1402 = vmul.f32 %v1397, %v1151
    %v1403 = vmul.f32 %v1399, %v1152
    %v1404 = vadd.f32 %v1388, %v1400
    %v1405 = vadd.f32 %v1389, %v1401
    %v1406 = vadd.f32 %v1390, %v1402
    %v1407 = vadd.f32 %v1391, %v1403
    %v1408 = vpack.c.bf16 %v1405, %v1404
    %v1409 = vpack.c.bf16 %v1407, %v1406
    %v1410 = vld [vmem:[#allocation2 + $0x18] sm:$0xff]
    %v1411 = vld [vmem:[#allocation2 + $0x48] sm:$0xff]
    %v1412 = vld [vmem:[#allocation2 + $0x78] sm:$0xff]
    %v1413 = vld [vmem:[#allocation2 + $0xa8] sm:$0xff]
    %v1414 = vmul.f32 %v1410, %v1149
    %v1415 = vmul.f32 %v1411, %v1150
    %v1416 = vmul.f32 %v1412, %v1149
    %v1417 = vmul.f32 %v1413, %v1150
    %1418 = vrot.lane.b32.xlu0 %v1410, 64
    %v1419 = vpop.permute.xlu0 %1418
    %1420 = vrot.lane.b32.xlu0 %v1411, 64
    %v1421 = vpop.permute.xlu0 %1420
    %1422 = vrot.lane.b32.xlu0 %v1412, 64
    %v1423 = vpop.permute.xlu0 %1422
    %1424 = vrot.lane.b32.xlu0 %v1413, 64
    %v1425 = vpop.permute.xlu0 %1424
    %v1426 = vmul.f32 %v1419, %v1151
    %v1427 = vmul.f32 %v1421, %v1152
    %v1428 = vmul.f32 %v1423, %v1151
    %v1429 = vmul.f32 %v1425, %v1152
    %v1430 = vadd.f32 %v1414, %v1426
    %v1431 = vadd.f32 %v1415, %v1427
    %v1432 = vadd.f32 %v1416, %v1428
    %v1433 = vadd.f32 %v1417, %v1429
    %v1434 = vpack.c.bf16 %v1431, %v1430
    %v1435 = vpack.c.bf16 %v1433, %v1432
    %v1436 = vld [vmem:[#allocation2 + $0x28] sm:$0xff]
    %v1437 = vld [vmem:[#allocation2 + $0x58] sm:$0xff]
    %v1438 = vld [vmem:[#allocation2 + $0x88] sm:$0xff]
    %v1439 = vld [vmem:[#allocation2 + $0xb8] sm:$0xff]
    %v1440 = vpack.c.bf16 %v1437, %v1436
    %v1441 = vpack.c.bf16 %v1439, %v1438
    %1442 = vmatprep.subr.bf16.mxu0 0
    %1443 = vmatpush1.bf16.xpose.msra.mxu0 %v1434
    %1444 = vmatprep.subr.bf16.mxu0 0
    %1445 = vmatpush1.bf16.xpose.msra.mxu0 %v1435
    %1446 = vmatprep.subr.bf16.mxu0 0
    %1447 = vmatpush1.bf16.xpose.msra.mxu0 0
    %1448 = vmatprep.subr.bf16.mxu0 0
    %1449 = vmatpush1.bf16.xpose.msra.mxu0 0
    %1450 = vmatprep.subr.bf16.mxu0 0
    %1451 = vmatpush1.bf16.xpose.msra.mxu0 0
    %1452 = vmatprep.subr.bf16.mxu0 0
    %1453 = vmatpush1.bf16.xpose.msra.mxu0 0
    %1454 = vmatprep.subr.bf16.mxu0 0
    %1455 = vmatpush1.bf16.xpose.msra.mxu0 0
    %1456 = vmatprep.subr.bf16.mxu0 0
    %1457 = vmatpush1.bf16.xpose.msra.mxu0 0
    %1458 = vmatprep.subr.bf16.mxu0 0
    %1459 = vmatpush1.bf16.xpose.msra.mxu0 0
    %1460 = vmatprep.subr.bf16.mxu0 0
    %1461 = vmatpush1.bf16.xpose.msra.mxu0 0
    %1462 = vmatprep.subr.bf16.mxu0 0
    %1463 = vmatpush1.bf16.xpose.msra.mxu0 0
    %1464 = vmatprep.subr.bf16.mxu0 0
    %1465 = vmatpush1.bf16.xpose.msra.mxu0 0
    %1466 = vmatprep.subr.bf16.mxu0 0
    %1467 = vmatpush1.bf16.xpose.msra.mxu0 0
    %1468 = vmatprep.subr.bf16.mxu0 0
    %1469 = vmatpush1.bf16.xpose.msra.mxu0 0
    %1470 = vmatprep.subr.bf16.mxu0 0
    %1471 = vmatpush1.bf16.xpose.msra.mxu0 0
    %1472 = vmatprep.subr.bf16.mxu0 0
    %1473 = vmatpush1.bf16.xpose.msra.mxu0 0
    %1474 = vmatprep.mubr.bf16.mxu0 0
    %1475 = vmatmul.mubr.bf16.gmra.mrb[0].mxu0 %v1408
    %v1476 = vpop.f32.mrb[0].mxu0
    %v1477 = vadd.f32 %v1153, %v1476
    %v1478 = vpop.f32.mrb[0].mxu0
    %v1479 = vpop.f32.mrb[0].mxu0
    %v1480 = vadd.f32 %v1154, %v1479
    %v1481 = vpop.f32.mrb[0].mxu0
    %1482 = vmatprep.mubr.bf16.mxu0 0
    %1483 = vmatmul.mubr.bf16.gmra.mrb[0].mxu0 %v1409
    %v1484 = vpop.f32.mrb[0].mxu0
    %v1485 = vadd.f32 %v1155, %v1484
    %v1486 = vpop.f32.mrb[0].mxu0
    %v1487 = vpop.f32.mrb[0].mxu0
    %v1488 = vadd.f32 %v1156, %v1487
    %v1489 = vpop.f32.mrb[0].mxu0
    %1490 = vdwg.mxu0
    %v1491 = vsel %vm1264, %v1477, -inf
    %1492 = vmax.xlane.f32.xlu0 %v1491
    %v1493 = vpop.xlane.xlu0 %1492
    %v1494 = vsel %vm1264, %v1480, -inf
    %1495 = vmax.xlane.f32.xlu0 %v1494
    %v1496 = vpop.xlane.xlu0 %1495
    %v1497 = vsel %vm1264, %v1485, -inf
    %1498 = vmax.xlane.f32.xlu0 %v1497
    %v1499 = vpop.xlane.xlu0 %1498
    %v1500 = vsel %vm1264, %v1488, -inf
    %1501 = vmax.xlane.f32.xlu0 %v1500
    %v1502 = vpop.xlane.xlu0 %1501
    %v1503 = vsub.f32 %v1477, %v1493
    %v1504 = vsub.f32 %v1480, %v1496
    %v1505 = vsub.f32 %v1485, %v1499
    %v1506 = vsub.f32 %v1488, %v1502
    %v1507 = vmul.f32 %v1503, 1.442695
    %v1508 = vpow.pop %v1507
    %v1509 = vmul.f32 %v1504, 1.442695
    %v1510 = vpow.pop %v1509
    %v1511 = vmul.f32 %v1505, 1.442695
    %v1512 = vpow.pop %v1511
    %v1513 = vmul.f32 %v1506, 1.442695
    %v1514 = vpow.pop %v1513
    %v1515 = vsel %vm1264, %v1508, 0.0
    %1516 = vadd.xlane.f32.xlu0 %v1515
    %v1517 = vpop.xlane.xlu0 %1516
    %v1518 = vsel %vm1264, %v1510, 0.0
    %1519 = vadd.xlane.f32.xlu0 %v1518
    %v1520 = vpop.xlane.xlu0 %1519
    %v1521 = vsel %vm1264, %v1512, 0.0
    %1522 = vadd.xlane.f32.xlu0 %v1521
    %v1523 = vpop.xlane.xlu0 %1522
    %v1524 = vsel %vm1264, %v1514, 0.0
    %1525 = vadd.xlane.f32.xlu0 %v1524
    %v1526 = vpop.xlane.xlu0 %1525
    %v1527 = vpack.c.bf16 %v1510, %v1508
    %v1528 = vpack.c.bf16 %v1514, %v1512
    %v1530 = vsel %vm1264, %v1527, 0
    %v1533 = vsel %vm1264, %v1528, 0
    %1535 = vmatprep.subr.bf16.mxu0 0
    %1536 = vmatpush1.bf16.msra.mxu0 %v1440
    %1537 = vmatprep.subr.bf16.mxu0 0
    %1538 = vmatpush1.bf16.msra.mxu0 %v1441
    %1539 = vmatprep.subr.bf16.mxu0 0
    %1540 = vmatpush1.bf16.msra.mxu0 0
    %1541 = vmatprep.subr.bf16.mxu0 0
    %1542 = vmatpush1.bf16.msra.mxu0 0
    %1543 = vmatprep.subr.bf16.mxu0 0
    %1544 = vmatpush1.bf16.msra.mxu0 0
    %1545 = vmatprep.subr.bf16.mxu0 0
    %1546 = vmatpush1.bf16.msra.mxu0 0
    %1547 = vmatprep.subr.bf16.mxu0 0
    %1548 = vmatpush1.bf16.msra.mxu0 0
    %1549 = vmatprep.subr.bf16.mxu0 0
    %1550 = vmatpush1.bf16.msra.mxu0 0
    %1551 = vmatprep.subr.bf16.mxu0 0
    %1552 = vmatpush1.bf16.msra.mxu0 0
    %1553 = vmatprep.subr.bf16.mxu0 0
    %1554 = vmatpush1.bf16.msra.mxu0 0
    %1555 = vmatprep.subr.bf16.mxu0 0
    %1556 = vmatpush1.bf16.msra.mxu0 0
    %1557 = vmatprep.subr.bf16.mxu0 0
    %1558 = vmatpush1.bf16.msra.mxu0 0
    %1559 = vmatprep.subr.bf16.mxu0 0
    %1560 = vmatpush1.bf16.msra.mxu0 0
    %1561 = vmatprep.subr.bf16.mxu0 0
    %1562 = vmatpush1.bf16.msra.mxu0 0
    %1563 = vmatprep.subr.bf16.mxu0 0
    %1564 = vmatpush1.bf16.msra.mxu0 0
    %1565 = vmatprep.subr.bf16.mxu0 0
    %1566 = vmatpush1.bf16.msra.mxu0 0
    %1567 = vmatprep.mubr.bf16.mxu0 0
    %1568 = vmatmul.mubr.bf16.gmra.mrb[0].mxu0 %v1530
    %v1569 = vpop.f32.mrb[0].mxu0
    %v1570 = vadd.f32 0.0, %v1569
    %v1571 = vpop.f32.mrb[0].mxu0
    %v1572 = vpop.f32.mrb[0].mxu0
    %v1573 = vadd.f32 0.0, %v1572
    %v1574 = vpop.f32.mrb[0].mxu0
    %1575 = vmatprep.mubr.bf16.mxu0 0
    %1576 = vmatmul.mubr.bf16.gmra.mrb[0].mxu0 %v1533
    %v1577 = vpop.f32.mrb[0].mxu0
    %v1578 = vadd.f32 0.0, %v1577
    %v1579 = vpop.f32.mrb[0].mxu0
    %v1580 = vpop.f32.mrb[0].mxu0
    %v1581 = vadd.f32 0.0, %v1580
    %v1582 = vpop.f32.mrb[0].mxu0
    %1583 = vdwg.mxu0
    %v1584 = vrcp.pop %v1517
    %v1585 = vrcp.pop %v1520
    %v1586 = vrcp.pop %v1523
    %v1587 = vrcp.pop %v1526
    %v1588 = vmul.f32 %v1570, %v1584
    %v1589 = vmul.f32 %v1573, %v1585
    %v1590 = vmul.f32 %v1578, %v1586
    %v1591 = vmul.f32 %v1581, %v1587
    %v1592 = vpack.c.bf16 %v1589, %v1588
    %v1593 = vpack.c.bf16 %v1591, %v1590
    %v1594 = vld [vmem:[%s4 + $0x80] sm:$0xff]
    %v1595 = vld [vmem:[%s4 + $0x88] sm:$0xff]
    %v1596 = vld [vmem:[%s4 + $0x90] sm:$0xff]
    %v1597 = vld [vmem:[%s4 + $0x98] sm:$0xff]
    %v1598 = vld [vmem:[%s4 + $0xa0] sm:$0xff]
    %v1599 = vld [vmem:[%s4 + $0xa8] sm:$0xff]
    %v1600 = vld [vmem:[%s4 + $0xb0] sm:$0xff]
    %v1601 = vld [vmem:[%s4 + $0xb8] sm:$0xff]
    %v1602 = vld [vmem:[%s4 + $0xc0] sm:$0xff]
    %v1603 = vld [vmem:[%s4 + $0xc8] sm:$0xff]
    %v1604 = vld [vmem:[%s4 + $0xd0] sm:$0xff]
    %v1605 = vld [vmem:[%s4 + $0xd8] sm:$0xff]
    %v1606 = vld [vmem:[%s4 + $0xe0] sm:$0xff]
    %v1607 = vld [vmem:[%s4 + $0xe8] sm:$0xff]
    %v1608 = vld [vmem:[%s4 + $0xf0] sm:$0xff]
    %v1609 = vld [vmem:[%s4 + $0xf8] sm:$0xff]
    %v1626 = vunpack.c.l.b16 %v1594
    %v1627 = vunpack.c.h.b16 %v1594
    %v1628 = vunpack.c.l.b16 %v1595
    %v1629 = vunpack.c.h.b16 %v1595
    %v1630 = vunpack.c.l.b16 %v1596
    %v1631 = vunpack.c.h.b16 %v1596
    %v1632 = vunpack.c.l.b16 %v1597
    %v1633 = vunpack.c.h.b16 %v1597
    %v1634 = vunpack.c.l.b16 %v1598
    %v1635 = vunpack.c.h.b16 %v1598
    %v1636 = vunpack.c.l.b16 %v1599
    %v1637 = vunpack.c.h.b16 %v1599
    %v1638 = vunpack.c.l.b16 %v1600
    %v1639 = vunpack.c.h.b16 %v1600
    %v1640 = vunpack.c.l.b16 %v1601
    %v1641 = vunpack.c.h.b16 %v1601
    %v1642 = vunpack.c.l.b16 %v1602
    %v1643 = vunpack.c.h.b16 %v1602
    %v1644 = vunpack.c.l.b16 %v1603
    %v1645 = vunpack.c.h.b16 %v1603
    %v1646 = vunpack.c.l.b16 %v1604
    %v1647 = vunpack.c.h.b16 %v1604
    %v1648 = vunpack.c.l.b16 %v1605
    %v1649 = vunpack.c.h.b16 %v1605
    %v1650 = vunpack.c.l.b16 %v1606
    %v1651 = vunpack.c.h.b16 %v1606
    %v1652 = vunpack.c.l.b16 %v1607
    %v1653 = vunpack.c.h.b16 %v1607
    %v1654 = vunpack.c.l.b16 %v1608
    %v1655 = vunpack.c.h.b16 %v1608
    %v1656 = vunpack.c.l.b16 %v1609
    %v1657 = vunpack.c.h.b16 %v1609
    %v1658 = vpack.c.b16 %v1628, %v1626
    %v1659 = vpack.c.b16 %v1629, %v1627
    %v1660 = vpack.c.b16 %v1632, %v1630
    %v1661 = vpack.c.b16 %v1633, %v1631
    %v1662 = vpack.c.b16 %v1636, %v1634
    %v1663 = vpack.c.b16 %v1637, %v1635
    %v1664 = vpack.c.b16 %v1640, %v1638
    %v1665 = vpack.c.b16 %v1641, %v1639
    %v1666 = vpack.c.b16 %v1644, %v1642
    %v1667 = vpack.c.b16 %v1645, %v1643
    %v1668 = vpack.c.b16 %v1648, %v1646
    %v1669 = vpack.c.b16 %v1649, %v1647
    %v1670 = vpack.c.b16 %v1652, %v1650
    %v1671 = vpack.c.b16 %v1653, %v1651
    %v1672 = vpack.c.b16 %v1656, %v1654
    %v1673 = vpack.c.b16 %v1657, %v1655
    %1690 = vmatprep.subr.bf16.mxu0 %v1659
    %1691 = vmatpush1.bf16.msra.mxu0 %v1658
    %1692 = vmatprep.subr.bf16.mxu0 %v1661
    %1693 = vmatpush1.bf16.msra.mxu0 %v1660
    %1694 = vmatprep.subr.bf16.mxu0 %v1663
    %1695 = vmatpush1.bf16.msra.mxu0 %v1662
    %1696 = vmatprep.subr.bf16.mxu0 %v1665
    %1697 = vmatpush1.bf16.msra.mxu0 %v1664
    %1698 = vmatprep.subr.bf16.mxu0 %v1667
    %1699 = vmatpush1.bf16.msra.mxu0 %v1666
    %1700 = vmatprep.subr.bf16.mxu0 %v1669
    %1701 = vmatpush1.bf16.msra.mxu0 %v1668
    %1702 = vmatprep.subr.bf16.mxu0 %v1671
    %1703 = vmatpush1.bf16.msra.mxu0 %v1670
    %1704 = vmatprep.subr.bf16.mxu0 %v1673
    %1705 = vmatpush1.bf16.msra.mxu0 %v1672
    %1706 = vmatprep.subr.bf16.mxu0 0
    %1707 = vmatpush1.bf16.msra.mxu0 0
    %1708 = vmatprep.subr.bf16.mxu0 0
    %1709 = vmatpush1.bf16.msra.mxu0 0
    %1710 = vmatprep.subr.bf16.mxu0 0
    %1711 = vmatpush1.bf16.msra.mxu0 0
    %1712 = vmatprep.subr.bf16.mxu0 0
    %1713 = vmatpush1.bf16.msra.mxu0 0
    %1714 = vmatprep.subr.bf16.mxu0 0
    %1715 = vmatpush1.bf16.msra.mxu0 0
    %1716 = vmatprep.subr.bf16.mxu0 0
    %1717 = vmatpush1.bf16.msra.mxu0 0
    %1718 = vmatprep.subr.bf16.mxu0 0
    %1719 = vmatpush1.bf16.msra.mxu0 0
    %1720 = vmatprep.subr.bf16.mxu0 0
    %1721 = vmatpush1.bf16.msra.mxu0 0
    %1722 = vmatprep.mubr.bf16.mxu0 0
    %1723 = vmatmul.mubr.bf16.gmra.mrb[0].mxu0 %v1592
    %v1724 = vpop.f32.mrb[0].mxu0
    %v1725 = vadd.f32 0.0, %v1724
    %v1726 = vpop.f32.mrb[0].mxu0
    %v1727 = vadd.f32 0.0, %v1726
    %v1728 = vpop.f32.mrb[0].mxu0
    %v1729 = vadd.f32 0.0, %v1728
    %v1730 = vpop.f32.mrb[0].mxu0
    %v1731 = vadd.f32 0.0, %v1730
    %1732 = vmatprep.mubr.bf16.mxu0 0
    %1733 = vmatmul.mubr.bf16.gmra.mrb[0].mxu0 %v1593
    %v1734 = vpop.f32.mrb[0].mxu0
    %v1735 = vadd.f32 0.0, %v1734
    %v1736 = vpop.f32.mrb[0].mxu0
    %v1737 = vadd.f32 0.0, %v1736
    %v1738 = vpop.f32.mrb[0].mxu0
    %v1739 = vadd.f32 0.0, %v1738
    %v1740 = vpop.f32.mrb[0].mxu0
    %v1741 = vadd.f32 0.0, %v1740
    %1742 = vdwg.mxu0
    %v1759 = vunpack.c.l.b16 %v1368
    %v1760 = vunpack.c.h.b16 %v1368
    %v1761 = vunpack.c.l.b16 %v1369
    %v1762 = vunpack.c.h.b16 %v1369
    %v1763 = vunpack.c.l.b16 %v1370
    %v1764 = vunpack.c.h.b16 %v1370
    %v1765 = vunpack.c.l.b16 %v1371
    %v1766 = vunpack.c.h.b16 %v1371
    %v1767 = vunpack.c.l.b16 %v1372
    %v1768 = vunpack.c.h.b16 %v1372
    %v1769 = vunpack.c.l.b16 %v1373
    %v1770 = vunpack.c.h.b16 %v1373
    %v1771 = vunpack.c.l.b16 %v1374
    %v1772 = vunpack.c.h.b16 %v1374
    %v1773 = vunpack.c.l.b16 %v1375
    %v1774 = vunpack.c.h.b16 %v1375
    %v1775 = vunpack.c.l.b16 %v1376
    %v1776 = vunpack.c.h.b16 %v1376
    %v1777 = vunpack.c.l.b16 %v1377
    %v1778 = vunpack.c.h.b16 %v1377
    %v1779 = vunpack.c.l.b16 %v1378
    %v1780 = vunpack.c.h.b16 %v1378
    %v1781 = vunpack.c.l.b16 %v1379
    %v1782 = vunpack.c.h.b16 %v1379
    %v1783 = vunpack.c.l.b16 %v1380
    %v1784 = vunpack.c.h.b16 %v1380
    %v1785 = vunpack.c.l.b16 %v1381
    %v1786 = vunpack.c.h.b16 %v1381
    %v1787 = vunpack.c.l.b16 %v1382
    %v1788 = vunpack.c.h.b16 %v1382
    %v1789 = vunpack.c.l.b16 %v1383
    %v1790 = vunpack.c.h.b16 %v1383
    %v1791 = vpack.c.b16 %v1761, %v1759
    %v1792 = vpack.c.b16 %v1762, %v1760
    %v1793 = vpack.c.b16 %v1765, %v1763
    %v1794 = vpack.c.b16 %v1766, %v1764
    %v1795 = vpack.c.b16 %v1769, %v1767
    %v1796 = vpack.c.b16 %v1770, %v1768
    %v1797 = vpack.c.b16 %v1773, %v1771
    %v1798 = vpack.c.b16 %v1774, %v1772
    %v1799 = vpack.c.b16 %v1777, %v1775
    %v1800 = vpack.c.b16 %v1778, %v1776
    %v1801 = vpack.c.b16 %v1781, %v1779
    %v1802 = vpack.c.b16 %v1782, %v1780
    %v1803 = vpack.c.b16 %v1785, %v1783
    %v1804 = vpack.c.b16 %v1786, %v1784
    %v1805 = vpack.c.b16 %v1789, %v1787
    %v1806 = vpack.c.b16 %v1790, %v1788
    %1823 = vmatprep.subr.bf16.mxu0 %v1792
    %1824 = vmatpush1.bf16.msra.mxu0 %v1791
    %1825 = vmatprep.subr.bf16.mxu0 %v1794
    %1826 = vmatpush1.bf16.msra.mxu0 %v1793
    %1827 = vmatprep.subr.bf16.mxu0 %v1796
    %1828 = vmatpush1.bf16.msra.mxu0 %v1795
    %1829 = vmatprep.subr.bf16.mxu0 %v1798
    %1830 = vmatpush1.bf16.msra.mxu0 %v1797
    %1831 = vmatprep.subr.bf16.mxu0 %v1800
    %1832 = vmatpush1.bf16.msra.mxu0 %v1799
    %1833 = vmatprep.subr.bf16.mxu0 %v1802
    %1834 = vmatpush1.bf16.msra.mxu0 %v1801
    %1835 = vmatprep.subr.bf16.mxu0 %v1804
    %1836 = vmatpush1.bf16.msra.mxu0 %v1803
    %1837 = vmatprep.subr.bf16.mxu0 %v1806
    %1838 = vmatpush1.bf16.msra.mxu0 %v1805
    %1839 = vmatprep.subr.bf16.mxu0 0
    %1840 = vmatpush1.bf16.msra.mxu0 0
    %1841 = vmatprep.subr.bf16.mxu0 0
    %1842 = vmatpush1.bf16.msra.mxu0 0
    %1843 = vmatprep.subr.bf16.mxu0 0
    %1844 = vmatpush1.bf16.msra.mxu0 0
    %1845 = vmatprep.subr.bf16.mxu0 0
    %1846 = vmatpush1.bf16.msra.mxu0 0
    %1847 = vmatprep.subr.bf16.mxu0 0
    %1848 = vmatpush1.bf16.msra.mxu0 0
    %1849 = vmatprep.subr.bf16.mxu0 0
    %1850 = vmatpush1.bf16.msra.mxu0 0
    %1851 = vmatprep.subr.bf16.mxu0 0
    %1852 = vmatpush1.bf16.msra.mxu0 0
    %1853 = vmatprep.subr.bf16.mxu0 0
    %1854 = vmatpush1.bf16.msra.mxu0 0
    %1855 = vmatprep.mubr.bf16.mxu0 0
    %1856 = vmatmul.mubr.bf16.gmra.mrb[0].mxu0 %v1366
    %v1857 = vpop.f32.mrb[0].mxu0
    %v1858 = vadd.f32 %v1725, %v1857
    %v1859 = vpop.f32.mrb[0].mxu0
    %v1860 = vadd.f32 %v1727, %v1859
    %v1861 = vpop.f32.mrb[0].mxu0
    %v1862 = vadd.f32 %v1729, %v1861
    %v1863 = vpop.f32.mrb[0].mxu0
    %v1864 = vadd.f32 %v1731, %v1863
    %1865 = vmatprep.mubr.bf16.mxu0 0
    %1866 = vmatmul.mubr.bf16.gmra.mrb[0].mxu0 %v1367
    %v1867 = vpop.f32.mrb[0].mxu0
    %v1868 = vadd.f32 %v1735, %v1867
    %v1869 = vpop.f32.mrb[0].mxu0
    %v1870 = vadd.f32 %v1737, %v1869
    %v1871 = vpop.f32.mrb[0].mxu0
    %v1872 = vadd.f32 %v1739, %v1871
    %v1873 = vpop.f32.mrb[0].mxu0
    %v1874 = vadd.f32 %v1741, %v1873
    %1875 = vdwg.mxu0
    %1876 = vst [vmem:[#allocation11] sm:$0xff] %v1858
    %1877 = vst [vmem:[#allocation11 + $0x8] sm:$0xff] %v1860
    %1878 = vst [vmem:[#allocation11 + $0x10] sm:$0xff] %v1862
    %1879 = vst [vmem:[#allocation11 + $0x18] sm:$0xff] %v1864
    %1880 = vst [vmem:[#allocation11 + $0x20] sm:$0xff] %v1868
    %1881 = vst [vmem:[#allocation11 + $0x28] sm:$0xff] %v1870
    %1882 = vst [vmem:[#allocation11 + $0x30] sm:$0xff] %v1872
    %1883 = vst [vmem:[#allocation11 + $0x38] sm:$0xff] %v1874
    // Predicated region
    $region50: #{encoder_forward.1} parent=1 // pred_check
      _
    $region51: #{encoder_forward.1} parent=1 // pred_check_branch
      %1885 = sbr.rel (0) target = $region53
    $region52: #{encoder_forward.1} parent=1 // pred_region
      %s1887 = ssub.s32 1024, 1024
      %1888 = vsyncadd [#allocation5], %s1887
      %s1889 = sshll.u32 [#allocation11], 4
      %s1890 = int_to_ptr.vmem [resolvable:$true] %s1889
      %1895 = dma.vmem_to_hbm [thread:$0]  %s1890, 1024, %s8, [#allocation5], 256, 256, 16
    $region53: #{encoder_forward.1} parent=1 // pred_fallthru
      _
    // Predicated region
    $region54: #{encoder_forward.1} parent=1 // pred_check
      _
    $region55: #{encoder_forward.1} parent=1 // pred_check_branch
      %1897 = sbr.rel (0) target = $region57
    $region56: #{encoder_forward.1} parent=1 // pred_region
      %1898 = dma.done [#allocation5], 1024
    $region57: #{encoder_forward.1} parent=1 // pred_fallthru
      _
    %1899 = vsyncpa [#allocation4], 1
    %1900 = vsyncpa [#allocation9], 1
    %1901 = vsyncpa [#allocation5], 1
    %1902 = vsyncpa [#allocation6], 1

</llo_original>
